<compile_context>
chip_gen: v7x
topology: tpu7x:2x2x1
jax: 0.10.0
libtpu: 0.0.40
codegen_flags: <defaults>
</compile_context>

<pallas_src>
import functools
import math

import jax
import jax.numpy as jnp
from jax.experimental import pallas as pl
from jax.experimental.pallas import tpu as pltpu


# ----------------------------------------------------------------------------
# Fused encoder-layer kernel
# ----------------------------------------------------------------------------

def _layernorm(x_f32, g_ref, b_ref, eps):
    mean = jnp.mean(x_f32, axis=-1, keepdims=True)
    var = jnp.mean(jnp.square(x_f32 - mean), axis=-1, keepdims=True)
    y = (x_f32 - mean) * jax.lax.rsqrt(var + eps)
    return y * g_ref[...].astype(jnp.float32) + b_ref[...].astype(jnp.float32)


def _encoder_kernel(x_ref, bias_ref,
                    wqkv_ref, bqkv_ref, wo_ref, bo_ref,
                    ln1_g_ref, ln1_b_ref,
                    w1_ref, b1_ref, w2_ref, b2_ref,
                    ln2_g_ref, ln2_b_ref,
                    lnf_g_ref, lnf_b_ref,
                    o_ref, *, num_heads, scale, eps):
    _, S, D = x_ref.shape
    dh = D // num_heads
    cdt = x_ref.dtype                           # MXU input dtype (bf16)

    h0 = x_ref[0]                               # (S, D) bf16
    bias = bias_ref[0].astype(jnp.float32)      # (1, S) additive key mask

    # ---- fused QKV projection: one (S, D) @ (D, 3D) MXU pass --------------
    qkv = jnp.dot(h0, wqkv_ref[...], preferred_element_type=jnp.float32)
    qkv = qkv + bqkv_ref[...].astype(jnp.float32)          # (S, 3D) f32
    q = qkv[:, 0:D] * scale
    k = qkv[:, D:2 * D]
    v = qkv[:, 2 * D:3 * D]

    # ---- per-head masked softmax attention (heads = static lane slices) ---
    ctx_heads = []
    for h in range(num_heads):
        lo, hi = h * dh, (h + 1) * dh
        qh, kh, vh = q[:, lo:hi], k[:, lo:hi], v[:, lo:hi]
        # q @ k^T via dot_general contracting the last dims (no explicit .T).
        s = jax.lax.dot_general(qh, kh, (((1,), (1,)), ((), ())),
                                preferred_element_type=jnp.float32)  # (S, S)
        s = s + bias                                       # mask padded keys
        m = jnp.max(s, axis=-1, keepdims=True)
        p = jnp.exp(s - m)
        p = p * pl.reciprocal(jnp.sum(p, axis=-1, keepdims=True), approx=True)
        ctx_heads.append(jnp.dot(p, vh, preferred_element_type=jnp.float32))
    ctx = jnp.concatenate(ctx_heads, axis=-1)              # (S, D) f32

    # ---- output projection + add & LayerNorm (post-norm) -------------------
    attn = jnp.dot(ctx.astype(cdt), wo_ref[...],
                   preferred_element_type=jnp.float32)
    attn = attn + bo_ref[...].astype(jnp.float32)
    h1 = _layernorm(h0.astype(jnp.float32) + attn, ln1_g_ref, ln1_b_ref, eps)

    # ---- ReLU feed-forward + add & LayerNorm --------------------------------
    f = jnp.dot(h1.astype(cdt), w1_ref[...],
                preferred_element_type=jnp.float32)
    f = jnp.maximum(f + b1_ref[...].astype(jnp.float32), 0.0)
    f = jnp.dot(f.astype(cdt), w2_ref[...],
                preferred_element_type=jnp.float32)
    f = f + b2_ref[...].astype(jnp.float32)
    h2 = _layernorm(h1 + f, ln2_g_ref, ln2_b_ref, eps)

    # ---- final encoder LayerNorm, first-token output ------------------------
    h3 = _layernorm(h2, lnf_g_ref, lnf_b_ref, eps)
    o_ref[0] = h3[0:1, :].astype(o_ref.dtype)


# ----------------------------------------------------------------------------
# Wrapper (mirrors TransformerEncoder.forward)
# ----------------------------------------------------------------------------

def transformer_encoder_forward(params, x_ids, mask, *, num_heads, eps=1e-5):
    """Returns hidden[:, 0, :] of a 1-layer post-norm transformer encoder."""
    B, S = x_ids.shape
    D = params["tok_emb"].shape[1]
    F = params["w1"].shape[1]
    dh = D // num_heads

    # TODO(synk): the embedding module is externally supplied in PyTorch;
    # modeled here as a plain token-embedding lookup (JAX glue, not Pallas).
    emb = jnp.take(params["tok_emb"], x_ids, axis=0)               # (B, S, D)
    # src_key_padding_mask = (mask == 0) -> additive -1e9 bias on key axis.
    bias = jnp.where(mask == 0, -1e9, 0.0).astype(jnp.float32).reshape(B, 1, S)

    w_spec = lambda shape: pl.BlockSpec(shape, lambda b: (0, 0))

    out = pl.pallas_call(
        functools.partial(_encoder_kernel, num_heads=num_heads,
                          scale=1.0 / math.sqrt(dh), eps=eps),
        out_shape=jax.ShapeDtypeStruct((B, 1, D), jnp.float32),
        grid=(B,),
        in_specs=[
            pl.BlockSpec((1, S, D), lambda b: (b, 0, 0)),   # embeddings
            pl.BlockSpec((1, 1, S), lambda b: (b, 0, 0)),   # key-mask bias
            w_spec((D, 3 * D)), w_spec((1, 3 * D)),         # Wqkv, bqkv
            w_spec((D, D)), w_spec((1, D)),                 # Wo, bo
            w_spec((1, D)), w_spec((1, D)),                 # LN1 gamma/beta
            w_spec((D, F)), w_spec((1, F)),                 # W1, b1
            w_spec((F, D)), w_spec((1, D)),                 # W2, b2
            w_spec((1, D)), w_spec((1, D)),                 # LN2 gamma/beta
            w_spec((1, D)), w_spec((1, D)),                 # final LN gamma/beta
        ],
        out_specs=pl.BlockSpec((1, 1, D), lambda b: (b, 0, 0)),
        compiler_params=pltpu.CompilerParams(
            dimension_semantics=("parallel",)),             # 2 TCs on v7x
    )(emb, bias,
      params["wqkv"], params["bqkv"], params["wo"], params["bo"],
      params["ln1_g"], params["ln1_b"],
      params["w1"], params["b1"], params["w2"], params["b2"],
      params["ln2_g"], params["ln2_b"],
      params["lnf_g"], params["lnf_b"])
    return out[:, 0, :]                                     # (B, D)


def init_params(key, vocab, d_model, dim_ff, dtype=jnp.bfloat16):
    ks = jax.random.split(key, 5)
    rnd = lambda k, shape: (0.02 * jax.random.normal(k, shape, jnp.float32)
                            ).astype(dtype)
    zeros = lambda shape: jnp.zeros(shape, dtype)
    ones = lambda shape: jnp.ones(shape, dtype)
    return dict(
        tok_emb=rnd(ks[0], (vocab, d_model)),
        wqkv=rnd(ks[1], (d_model, 3 * d_model)), bqkv=zeros((1, 3 * d_model)),
        wo=rnd(ks[2], (d_model, d_model)), bo=zeros((1, d_model)),
        ln1_g=ones((1, d_model)), ln1_b=zeros((1, d_model)),
        w1=rnd(ks[3], (d_model, dim_ff)), b1=zeros((1, dim_ff)),
        w2=rnd(ks[4], (dim_ff, d_model)), b2=zeros((1, d_model)),
        ln2_g=ones((1, d_model)), ln2_b=zeros((1, d_model)),
        lnf_g=ones((1, d_model)), lnf_b=zeros((1, d_model)),
    )


# ----------------------------------------------------------------------------
# Main
# ----------------------------------------------------------------------------

if __name__ == "__main__":
    B, S, D, NHEAD, DFF, VOCAB = 2, 8, 64, 8, 128, 128

    key = jax.random.PRNGKey(0)
    k_par, k_ids, k_len = jax.random.split(key, 3)

    params = init_params(k_par, VOCAB, D, DFF)
    x_ids = jax.random.randint(k_ids, (B, S), 0, VOCAB, dtype=jnp.int32)
    lens = jax.random.randint(k_len, (B,), S // 2, S + 1)
    mask = (jnp.arange(S)[None, :] < lens[:, None]).astype(jnp.int32)  # 1=keep

    fwd = jax.jit(functools.partial(transformer_encoder_forward,
                                    num_heads=NHEAD))
    out = fwd(params, x_ids, mask)
    out = jax.block_until_ready(out)

    assert out.shape == (B, D), out.shape
    assert bool(jnp.all(jnp.isfinite(out)))
    print("KERNEL_OK")
</pallas_src>

<mosaic_0001>
module attributes {stable_mosaic.version = 11 : i64} {
  func.func @_encoder_kernel(%arg0: i32, %arg1: memref<1x8x64xbf16, #tpu.memory_space<vmem>>, %arg2: memref<1x1x8xf32, #tpu.memory_space<vmem>>, %arg3: memref<64x192xbf16, #tpu.memory_space<vmem>>, %arg4: memref<1x192xbf16, #tpu.memory_space<vmem>>, %arg5: memref<64x64xbf16, #tpu.memory_space<vmem>>, %arg6: memref<1x64xbf16, #tpu.memory_space<vmem>>, %arg7: memref<1x64xbf16, #tpu.memory_space<vmem>>, %arg8: memref<1x64xbf16, #tpu.memory_space<vmem>>, %arg9: memref<64x128xbf16, #tpu.memory_space<vmem>>, %arg10: memref<1x128xbf16, #tpu.memory_space<vmem>>, %arg11: memref<128x64xbf16, #tpu.memory_space<vmem>>, %arg12: memref<1x64xbf16, #tpu.memory_space<vmem>>, %arg13: memref<1x64xbf16, #tpu.memory_space<vmem>>, %arg14: memref<1x64xbf16, #tpu.memory_space<vmem>>, %arg15: memref<1x64xbf16, #tpu.memory_space<vmem>>, %arg16: memref<1x64xbf16, #tpu.memory_space<vmem>>, %arg17: memref<1x1x64xf32, #tpu.memory_space<vmem>>) attributes {dimension_semantics = [#tpu.dimension_semantics<parallel>], iteration_bounds = array<i64: 2>, scalar_prefetch = 0 : i64, scratch_operands = 0 : i64, tpu.core_type = #tpu.core_type<tc>, window_params = [{transform_indices = @transform_0, window_bounds = array<i64: 1, 8, 64>}, {transform_indices = @transform_1, window_bounds = array<i64: 1, 1, 8>}, {pipeline_mode = #tpu.pipeline_mode<synchronous>, transform_indices = @transform_2, window_bounds = array<i64: 64, 192>}, {pipeline_mode = #tpu.pipeline_mode<synchronous>, transform_indices = @transform_3, window_bounds = array<i64: 1, 192>}, {pipeline_mode = #tpu.pipeline_mode<synchronous>, transform_indices = @transform_4, window_bounds = array<i64: 64, 64>}, {pipeline_mode = #tpu.pipeline_mode<synchronous>, transform_indices = @transform_5, window_bounds = array<i64: 1, 64>}, {pipeline_mode = #tpu.pipeline_mode<synchronous>, transform_indices = @transform_6, window_bounds = array<i64: 1, 64>}, {pipeline_mode = #tpu.pipeline_mode<synchronous>, transform_indices = @transform_7, window_bounds = array<i64: 1, 64>}, {pipeline_mode = #tpu.pipeline_mode<synchronous>, transform_indices = @transform_8, window_bounds = array<i64: 64, 128>}, {pipeline_mode = #tpu.pipeline_mode<synchronous>, transform_indices = @transform_9, window_bounds = array<i64: 1, 128>}, {pipeline_mode = #tpu.pipeline_mode<synchronous>, transform_indices = @transform_10, window_bounds = array<i64: 128, 64>}, {pipeline_mode = #tpu.pipeline_mode<synchronous>, transform_indices = @transform_11, window_bounds = array<i64: 1, 64>}, {pipeline_mode = #tpu.pipeline_mode<synchronous>, transform_indices = @transform_12, window_bounds = array<i64: 1, 64>}, {pipeline_mode = #tpu.pipeline_mode<synchronous>, transform_indices = @transform_13, window_bounds = array<i64: 1, 64>}, {pipeline_mode = #tpu.pipeline_mode<synchronous>, transform_indices = @transform_14, window_bounds = array<i64: 1, 64>}, {pipeline_mode = #tpu.pipeline_mode<synchronous>, transform_indices = @transform_15, window_bounds = array<i64: 1, 64>}, {transform_indices = @transform_16, window_bounds = array<i64: 1, 1, 64>}]} {
    %c0 = arith.constant 0 : index
    %c0_0 = arith.constant 0 : index
    %c0_1 = arith.constant 0 : index
    %0 = vector.load %arg1[%c0, %c0_0, %c0_1] : memref<1x8x64xbf16, #tpu.memory_space<vmem>>, vector<1x8x64xbf16>
    %1 = vector.shape_cast %0 : vector<1x8x64xbf16> to vector<8x64xbf16>
    %c0_2 = arith.constant 0 : index
    %c0_3 = arith.constant 0 : index
    %c0_4 = arith.constant 0 : index
    %2 = vector.load %arg2[%c0_2, %c0_3, %c0_4] : memref<1x1x8xf32, #tpu.memory_space<vmem>>, vector<1x1x8xf32>
    %3 = vector.shape_cast %2 : vector<1x1x8xf32> to vector<1x8xf32>
    %c0_5 = arith.constant 0 : index
    %c0_6 = arith.constant 0 : index
    %4 = vector.load %arg3[%c0_5, %c0_6] : memref<64x192xbf16, #tpu.memory_space<vmem>>, vector<64x192xbf16>
    %cst = arith.constant dense<0.000000e+00> : vector<8x192xf32>
    %5 = tpu.matmul %1, %4, %cst {dimension_numbers = #tpu.dot_dimension_numbers<[1], [0], [0], [1], [0, 0, 1, 1], [], []>} : vector<8x64xbf16>, vector<64x192xbf16>, vector<8x192xf32> -> vector<8x192xf32>
    %c0_7 = arith.constant 0 : index
    %c0_8 = arith.constant 0 : index
    %6 = vector.load %arg4[%c0_7, %c0_8] : memref<1x192xbf16, #tpu.memory_space<vmem>>, vector<1x192xbf16>
    %7 = arith.extf %6 : vector<1x192xbf16> to vector<1x192xf32>
    %8 = vector.broadcast %7 : vector<1x192xf32> to vector<8x192xf32>
    %9 = arith.addf %5, %8 : vector<8x192xf32>
    %10 = vector.extract_strided_slice %9 {offsets = [0, 0], sizes = [8, 64], strides = [1, 1]} : vector<8x192xf32> to vector<8x64xf32>
    %cst_9 = arith.constant 0.353553385 : f32
    %11 = vector.broadcast %cst_9 : f32 to vector<8x64xf32>
    %12 = arith.mulf %10, %11 : vector<8x64xf32>
    %13 = vector.extract_strided_slice %9 {offsets = [0, 64], sizes = [8, 64], strides = [1, 1]} : vector<8x192xf32> to vector<8x64xf32>
    %14 = vector.extract_strided_slice %9 {offsets = [0, 128], sizes = [8, 64], strides = [1, 1]} : vector<8x192xf32> to vector<8x64xf32>
    %15 = vector.extract_strided_slice %12 {offsets = [0, 0], sizes = [8, 8], strides = [1, 1]} : vector<8x64xf32> to vector<8x8xf32>
    %16 = vector.extract_strided_slice %13 {offsets = [0, 0], sizes = [8, 8], strides = [1, 1]} : vector<8x64xf32> to vector<8x8xf32>
    %17 = vector.extract_strided_slice %14 {offsets = [0, 0], sizes = [8, 8], strides = [1, 1]} : vector<8x64xf32> to vector<8x8xf32>
    %cst_10 = arith.constant dense<0.000000e+00> : vector<8x8xf32>
    %18 = tpu.matmul %15, %16, %cst_10 {dimension_numbers = #tpu.dot_dimension_numbers<[1], [1], [0], [0], [0, 0, 1, 0], [], []>} : vector<8x8xf32>, vector<8x8xf32>, vector<8x8xf32> -> vector<8x8xf32>
    %19 = vector.broadcast %3 : vector<1x8xf32> to vector<8x8xf32>
    %20 = arith.addf %18, %19 : vector<8x8xf32>
    %cst_11 = arith.constant dense<0xFF800000> : vector<8xf32>
    %21 = vector.multi_reduction <maximumf>, %20, %cst_11 [1] : vector<8x8xf32> to vector<8xf32>
    %22 = vector.shape_cast %21 : vector<8xf32> to vector<8x1xf32>
    %23 = vector.broadcast %22 : vector<8x1xf32> to vector<8x8xf32>
    %24 = arith.subf %20, %23 : vector<8x8xf32>
    %25 = math.exp %24 : vector<8x8xf32>
    %cst_12 = arith.constant dense<0.000000e+00> : vector<8xf32>
    %26 = vector.multi_reduction <add>, %25, %cst_12 [1] : vector<8x8xf32> to vector<8xf32>
    %27 = vector.shape_cast %26 : vector<8xf32> to vector<8x1xf32>
    %28 = tpu.reciprocal %27 {approx = true} : vector<8x1xf32> -> vector<8x1xf32>
    %29 = vector.broadcast %28 : vector<8x1xf32> to vector<8x8xf32>
    %30 = arith.mulf %25, %29 : vector<8x8xf32>
    %cst_13 = arith.constant dense<0.000000e+00> : vector<8x8xf32>
    %31 = tpu.matmul %30, %17, %cst_13 {dimension_numbers = #tpu.dot_dimension_numbers<[1], [0], [0], [1], [0, 0, 1, 1], [], []>} : vector<8x8xf32>, vector<8x8xf32>, vector<8x8xf32> -> vector<8x8xf32>
    %32 = vector.extract_strided_slice %12 {offsets = [0, 8], sizes = [8, 8], strides = [1, 1]} : vector<8x64xf32> to vector<8x8xf32>
    %33 = vector.extract_strided_slice %13 {offsets = [0, 8], sizes = [8, 8], strides = [1, 1]} : vector<8x64xf32> to vector<8x8xf32>
    %34 = vector.extract_strided_slice %14 {offsets = [0, 8], sizes = [8, 8], strides = [1, 1]} : vector<8x64xf32> to vector<8x8xf32>
    %cst_14 = arith.constant dense<0.000000e+00> : vector<8x8xf32>
    %35 = tpu.matmul %32, %33, %cst_14 {dimension_numbers = #tpu.dot_dimension_numbers<[1], [1], [0], [0], [0, 0, 1, 0], [], []>} : vector<8x8xf32>, vector<8x8xf32>, vector<8x8xf32> -> vector<8x8xf32>
    %36 = vector.broadcast %3 : vector<1x8xf32> to vector<8x8xf32>
    %37 = arith.addf %35, %36 : vector<8x8xf32>
    %cst_15 = arith.constant dense<0xFF800000> : vector<8xf32>
    %38 = vector.multi_reduction <maximumf>, %37, %cst_15 [1] : vector<8x8xf32> to vector<8xf32>
    %39 = vector.shape_cast %38 : vector<8xf32> to vector<8x1xf32>
    %40 = vector.broadcast %39 : vector<8x1xf32> to vector<8x8xf32>
    %41 = arith.subf %37, %40 : vector<8x8xf32>
    %42 = math.exp %41 : vector<8x8xf32>
    %cst_16 = arith.constant dense<0.000000e+00> : vector<8xf32>
    %43 = vector.multi_reduction <add>, %42, %cst_16 [1] : vector<8x8xf32> to vector<8xf32>
    %44 = vector.shape_cast %43 : vector<8xf32> to vector<8x1xf32>
    %45 = tpu.reciprocal %44 {approx = true} : vector<8x1xf32> -> vector<8x1xf32>
    %46 = vector.broadcast %45 : vector<8x1xf32> to vector<8x8xf32>
    %47 = arith.mulf %42, %46 : vector<8x8xf32>
    %cst_17 = arith.constant dense<0.000000e+00> : vector<8x8xf32>
    %48 = tpu.matmul %47, %34, %cst_17 {dimension_numbers = #tpu.dot_dimension_numbers<[1], [0], [0], [1], [0, 0, 1, 1], [], []>} : vector<8x8xf32>, vector<8x8xf32>, vector<8x8xf32> -> vector<8x8xf32>
    %49 = vector.extract_strided_slice %12 {offsets = [0, 16], sizes = [8, 8], strides = [1, 1]} : vector<8x64xf32> to vector<8x8xf32>
    %50 = vector.extract_strided_slice %13 {offsets = [0, 16], sizes = [8, 8], strides = [1, 1]} : vector<8x64xf32> to vector<8x8xf32>
    %51 = vector.extract_strided_slice %14 {offsets = [0, 16], sizes = [8, 8], strides = [1, 1]} : vector<8x64xf32> to vector<8x8xf32>
    %cst_18 = arith.constant dense<0.000000e+00> : vector<8x8xf32>
    %52 = tpu.matmul %49, %50, %cst_18 {dimension_numbers = #tpu.dot_dimension_numbers<[1], [1], [0], [0], [0, 0, 1, 0], [], []>} : vector<8x8xf32>, vector<8x8xf32>, vector<8x8xf32> -> vector<8x8xf32>
    %53 = vector.broadcast %3 : vector<1x8xf32> to vector<8x8xf32>
    %54 = arith.addf %52, %53 : vector<8x8xf32>
    %cst_19 = arith.constant dense<0xFF800000> : vector<8xf32>
    %55 = vector.multi_reduction <maximumf>, %54, %cst_19 [1] : vector<8x8xf32> to vector<8xf32>
    %56 = vector.shape_cast %55 : vector<8xf32> to vector<8x1xf32>
    %57 = vector.broadcast %56 : vector<8x1xf32> to vector<8x8xf32>
    %58 = arith.subf %54, %57 : vector<8x8xf32>
    %59 = math.exp %58 : vector<8x8xf32>
    %cst_20 = arith.constant dense<0.000000e+00> : vector<8xf32>
    %60 = vector.multi_reduction <add>, %59, %cst_20 [1] : vector<8x8xf32> to vector<8xf32>
    %61 = vector.shape_cast %60 : vector<8xf32> to vector<8x1xf32>
    %62 = tpu.reciprocal %61 {approx = true} : vector<8x1xf32> -> vector<8x1xf32>
    %63 = vector.broadcast %62 : vector<8x1xf32> to vector<8x8xf32>
    %64 = arith.mulf %59, %63 : vector<8x8xf32>
    %cst_21 = arith.constant dense<0.000000e+00> : vector<8x8xf32>
    %65 = tpu.matmul %64, %51, %cst_21 {dimension_numbers = #tpu.dot_dimension_numbers<[1], [0], [0], [1], [0, 0, 1, 1], [], []>} : vector<8x8xf32>, vector<8x8xf32>, vector<8x8xf32> -> vector<8x8xf32>
    %66 = vector.extract_strided_slice %12 {offsets = [0, 24], sizes = [8, 8], strides = [1, 1]} : vector<8x64xf32> to vector<8x8xf32>
    %67 = vector.extract_strided_slice %13 {offsets = [0, 24], sizes = [8, 8], strides = [1, 1]} : vector<8x64xf32> to vector<8x8xf32>
    %68 = vector.extract_strided_slice %14 {offsets = [0, 24], sizes = [8, 8], strides = [1, 1]} : vector<8x64xf32> to vector<8x8xf32>
    %cst_22 = arith.constant dense<0.000000e+00> : vector<8x8xf32>
    %69 = tpu.matmul %66, %67, %cst_22 {dimension_numbers = #tpu.dot_dimension_numbers<[1], [1], [0], [0], [0, 0, 1, 0], [], []>} : vector<8x8xf32>, vector<8x8xf32>, vector<8x8xf32> -> vector<8x8xf32>
    %70 = vector.broadcast %3 : vector<1x8xf32> to vector<8x8xf32>
    %71 = arith.addf %69, %70 : vector<8x8xf32>
    %cst_23 = arith.constant dense<0xFF800000> : vector<8xf32>
    %72 = vector.multi_reduction <maximumf>, %71, %cst_23 [1] : vector<8x8xf32> to vector<8xf32>
    %73 = vector.shape_cast %72 : vector<8xf32> to vector<8x1xf32>
    %74 = vector.broadcast %73 : vector<8x1xf32> to vector<8x8xf32>
    %75 = arith.subf %71, %74 : vector<8x8xf32>
    %76 = math.exp %75 : vector<8x8xf32>
    %cst_24 = arith.constant dense<0.000000e+00> : vector<8xf32>
    %77 = vector.multi_reduction <add>, %76, %cst_24 [1] : vector<8x8xf32> to vector<8xf32>
    %78 = vector.shape_cast %77 : vector<8xf32> to vector<8x1xf32>
    %79 = tpu.reciprocal %78 {approx = true} : vector<8x1xf32> -> vector<8x1xf32>
    %80 = vector.broadcast %79 : vector<8x1xf32> to vector<8x8xf32>
    %81 = arith.mulf %76, %80 : vector<8x8xf32>
    %cst_25 = arith.constant dense<0.000000e+00> : vector<8x8xf32>
    %82 = tpu.matmul %81, %68, %cst_25 {dimension_numbers = #tpu.dot_dimension_numbers<[1], [0], [0], [1], [0, 0, 1, 1], [], []>} : vector<8x8xf32>, vector<8x8xf32>, vector<8x8xf32> -> vector<8x8xf32>
    %83 = vector.extract_strided_slice %12 {offsets = [0, 32], sizes = [8, 8], strides = [1, 1]} : vector<8x64xf32> to vector<8x8xf32>
    %84 = vector.extract_strided_slice %13 {offsets = [0, 32], sizes = [8, 8], strides = [1, 1]} : vector<8x64xf32> to vector<8x8xf32>
    %85 = vector.extract_strided_slice %14 {offsets = [0, 32], sizes = [8, 8], strides = [1, 1]} : vector<8x64xf32> to vector<8x8xf32>
    %cst_26 = arith.constant dense<0.000000e+00> : vector<8x8xf32>
    %86 = tpu.matmul %83, %84, %cst_26 {dimension_numbers = #tpu.dot_dimension_numbers<[1], [1], [0], [0], [0, 0, 1, 0], [], []>} : vector<8x8xf32>, vector<8x8xf32>, vector<8x8xf32> -> vector<8x8xf32>
    %87 = vector.broadcast %3 : vector<1x8xf32> to vector<8x8xf32>
    %88 = arith.addf %86, %87 : vector<8x8xf32>
    %cst_27 = arith.constant dense<0xFF800000> : vector<8xf32>
    %89 = vector.multi_reduction <maximumf>, %88, %cst_27 [1] : vector<8x8xf32> to vector<8xf32>
    %90 = vector.shape_cast %89 : vector<8xf32> to vector<8x1xf32>
    %91 = vector.broadcast %90 : vector<8x1xf32> to vector<8x8xf32>
    %92 = arith.subf %88, %91 : vector<8x8xf32>
    %93 = math.exp %92 : vector<8x8xf32>
    %cst_28 = arith.constant dense<0.000000e+00> : vector<8xf32>
    %94 = vector.multi_reduction <add>, %93, %cst_28 [1] : vector<8x8xf32> to vector<8xf32>
    %95 = vector.shape_cast %94 : vector<8xf32> to vector<8x1xf32>
    %96 = tpu.reciprocal %95 {approx = true} : vector<8x1xf32> -> vector<8x1xf32>
    %97 = vector.broadcast %96 : vector<8x1xf32> to vector<8x8xf32>
    %98 = arith.mulf %93, %97 : vector<8x8xf32>
    %cst_29 = arith.constant dense<0.000000e+00> : vector<8x8xf32>
    %99 = tpu.matmul %98, %85, %cst_29 {dimension_numbers = #tpu.dot_dimension_numbers<[1], [0], [0], [1], [0, 0, 1, 1], [], []>} : vector<8x8xf32>, vector<8x8xf32>, vector<8x8xf32> -> vector<8x8xf32>
    %100 = vector.extract_strided_slice %12 {offsets = [0, 40], sizes = [8, 8], strides = [1, 1]} : vector<8x64xf32> to vector<8x8xf32>
    %101 = vector.extract_strided_slice %13 {offsets = [0, 40], sizes = [8, 8], strides = [1, 1]} : vector<8x64xf32> to vector<8x8xf32>
    %102 = vector.extract_strided_slice %14 {offsets = [0, 40], sizes = [8, 8], strides = [1, 1]} : vector<8x64xf32> to vector<8x8xf32>
    %cst_30 = arith.constant dense<0.000000e+00> : vector<8x8xf32>
    %103 = tpu.matmul %100, %101, %cst_30 {dimension_numbers = #tpu.dot_dimension_numbers<[1], [1], [0], [0], [0, 0, 1, 0], [], []>} : vector<8x8xf32>, vector<8x8xf32>, vector<8x8xf32> -> vector<8x8xf32>
    %104 = vector.broadcast %3 : vector<1x8xf32> to vector<8x8xf32>
    %105 = arith.addf %103, %104 : vector<8x8xf32>
    %cst_31 = arith.constant dense<0xFF800000> : vector<8xf32>
    %106 = vector.multi_reduction <maximumf>, %105, %cst_31 [1] : vector<8x8xf32> to vector<8xf32>
    %107 = vector.shape_cast %106 : vector<8xf32> to vector<8x1xf32>
    %108 = vector.broadcast %107 : vector<8x1xf32> to vector<8x8xf32>
    %109 = arith.subf %105, %108 : vector<8x8xf32>
    %110 = math.exp %109 : vector<8x8xf32>
    %cst_32 = arith.constant dense<0.000000e+00> : vector<8xf32>
    %111 = vector.multi_reduction <add>, %110, %cst_32 [1] : vector<8x8xf32> to vector<8xf32>
    %112 = vector.shape_cast %111 : vector<8xf32> to vector<8x1xf32>
    %113 = tpu.reciprocal %112 {approx = true} : vector<8x1xf32> -> vector<8x1xf32>
    %114 = vector.broadcast %113 : vector<8x1xf32> to vector<8x8xf32>
    %115 = arith.mulf %110, %114 : vector<8x8xf32>
    %cst_33 = arith.constant dense<0.000000e+00> : vector<8x8xf32>
    %116 = tpu.matmul %115, %102, %cst_33 {dimension_numbers = #tpu.dot_dimension_numbers<[1], [0], [0], [1], [0, 0, 1, 1], [], []>} : vector<8x8xf32>, vector<8x8xf32>, vector<8x8xf32> -> vector<8x8xf32>
    %117 = vector.extract_strided_slice %12 {offsets = [0, 48], sizes = [8, 8], strides = [1, 1]} : vector<8x64xf32> to vector<8x8xf32>
    %118 = vector.extract_strided_slice %13 {offsets = [0, 48], sizes = [8, 8], strides = [1, 1]} : vector<8x64xf32> to vector<8x8xf32>
    %119 = vector.extract_strided_slice %14 {offsets = [0, 48], sizes = [8, 8], strides = [1, 1]} : vector<8x64xf32> to vector<8x8xf32>
    %cst_34 = arith.constant dense<0.000000e+00> : vector<8x8xf32>
    %120 = tpu.matmul %117, %118, %cst_34 {dimension_numbers = #tpu.dot_dimension_numbers<[1], [1], [0], [0], [0, 0, 1, 0], [], []>} : vector<8x8xf32>, vector<8x8xf32>, vector<8x8xf32> -> vector<8x8xf32>
    %121 = vector.broadcast %3 : vector<1x8xf32> to vector<8x8xf32>
    %122 = arith.addf %120, %121 : vector<8x8xf32>
    %cst_35 = arith.constant dense<0xFF800000> : vector<8xf32>
    %123 = vector.multi_reduction <maximumf>, %122, %cst_35 [1] : vector<8x8xf32> to vector<8xf32>
    %124 = vector.shape_cast %123 : vector<8xf32> to vector<8x1xf32>
    %125 = vector.broadcast %124 : vector<8x1xf32> to vector<8x8xf32>
    %126 = arith.subf %122, %125 : vector<8x8xf32>
    %127 = math.exp %126 : vector<8x8xf32>
    %cst_36 = arith.constant dense<0.000000e+00> : vector<8xf32>
    %128 = vector.multi_reduction <add>, %127, %cst_36 [1] : vector<8x8xf32> to vector<8xf32>
    %129 = vector.shape_cast %128 : vector<8xf32> to vector<8x1xf32>
    %130 = tpu.reciprocal %129 {approx = true} : vector<8x1xf32> -> vector<8x1xf32>
    %131 = vector.broadcast %130 : vector<8x1xf32> to vector<8x8xf32>
    %132 = arith.mulf %127, %131 : vector<8x8xf32>
    %cst_37 = arith.constant dense<0.000000e+00> : vector<8x8xf32>
    %133 = tpu.matmul %132, %119, %cst_37 {dimension_numbers = #tpu.dot_dimension_numbers<[1], [0], [0], [1], [0, 0, 1, 1], [], []>} : vector<8x8xf32>, vector<8x8xf32>, vector<8x8xf32> -> vector<8x8xf32>
    %134 = vector.extract_strided_slice %12 {offsets = [0, 56], sizes = [8, 8], strides = [1, 1]} : vector<8x64xf32> to vector<8x8xf32>
    %135 = vector.extract_strided_slice %13 {offsets = [0, 56], sizes = [8, 8], strides = [1, 1]} : vector<8x64xf32> to vector<8x8xf32>
    %136 = vector.extract_strided_slice %14 {offsets = [0, 56], sizes = [8, 8], strides = [1, 1]} : vector<8x64xf32> to vector<8x8xf32>
    %cst_38 = arith.constant dense<0.000000e+00> : vector<8x8xf32>
    %137 = tpu.matmul %134, %135, %cst_38 {dimension_numbers = #tpu.dot_dimension_numbers<[1], [1], [0], [0], [0, 0, 1, 0], [], []>} : vector<8x8xf32>, vector<8x8xf32>, vector<8x8xf32> -> vector<8x8xf32>
    %138 = vector.broadcast %3 : vector<1x8xf32> to vector<8x8xf32>
    %139 = arith.addf %137, %138 : vector<8x8xf32>
    %cst_39 = arith.constant dense<0xFF800000> : vector<8xf32>
    %140 = vector.multi_reduction <maximumf>, %139, %cst_39 [1] : vector<8x8xf32> to vector<8xf32>
    %141 = vector.shape_cast %140 : vector<8xf32> to vector<8x1xf32>
    %142 = vector.broadcast %141 : vector<8x1xf32> to vector<8x8xf32>
    %143 = arith.subf %139, %142 : vector<8x8xf32>
    %144 = math.exp %143 : vector<8x8xf32>
    %cst_40 = arith.constant dense<0.000000e+00> : vector<8xf32>
    %145 = vector.multi_reduction <add>, %144, %cst_40 [1] : vector<8x8xf32> to vector<8xf32>
    %146 = vector.shape_cast %145 : vector<8xf32> to vector<8x1xf32>
    %147 = tpu.reciprocal %146 {approx = true} : vector<8x1xf32> -> vector<8x1xf32>
    %148 = vector.broadcast %147 : vector<8x1xf32> to vector<8x8xf32>
    %149 = arith.mulf %144, %148 : vector<8x8xf32>
    %cst_41 = arith.constant dense<0.000000e+00> : vector<8x8xf32>
    %150 = tpu.matmul %149, %136, %cst_41 {dimension_numbers = #tpu.dot_dimension_numbers<[1], [0], [0], [1], [0, 0, 1, 1], [], []>} : vector<8x8xf32>, vector<8x8xf32>, vector<8x8xf32> -> vector<8x8xf32>
    %151 = tpu.concatenate %31, %48, %65, %82, %99, %116, %133, %150 in 1 : vector<8x8xf32>, vector<8x8xf32>, vector<8x8xf32>, vector<8x8xf32>, vector<8x8xf32>, vector<8x8xf32>, vector<8x8xf32>, vector<8x8xf32> -> vector<8x64xf32>
    %152 = arith.truncf %151 : vector<8x64xf32> to vector<8x64xbf16>
    %c0_42 = arith.constant 0 : index
    %c0_43 = arith.constant 0 : index
    %153 = vector.load %arg5[%c0_42, %c0_43] : memref<64x64xbf16, #tpu.memory_space<vmem>>, vector<64x64xbf16>
    %cst_44 = arith.constant dense<0.000000e+00> : vector<8x64xf32>
    %154 = tpu.matmul %152, %153, %cst_44 {dimension_numbers = #tpu.dot_dimension_numbers<[1], [0], [0], [1], [0, 0, 1, 1], [], []>} : vector<8x64xbf16>, vector<64x64xbf16>, vector<8x64xf32> -> vector<8x64xf32>
    %c0_45 = arith.constant 0 : index
    %c0_46 = arith.constant 0 : index
    %155 = vector.load %arg6[%c0_45, %c0_46] : memref<1x64xbf16, #tpu.memory_space<vmem>>, vector<1x64xbf16>
    %156 = arith.extf %155 : vector<1x64xbf16> to vector<1x64xf32>
    %157 = vector.broadcast %156 : vector<1x64xf32> to vector<8x64xf32>
    %158 = arith.addf %154, %157 : vector<8x64xf32>
    %159 = arith.extf %1 : vector<8x64xbf16> to vector<8x64xf32>
    %160 = arith.addf %159, %158 : vector<8x64xf32>
    %cst_47 = arith.constant dense<0.000000e+00> : vector<8xf32>
    %161 = vector.multi_reduction <add>, %160, %cst_47 [1] : vector<8x64xf32> to vector<8xf32>
    %162 = vector.shape_cast %161 : vector<8xf32> to vector<8x1xf32>
    %cst_48 = arith.constant 6.400000e+01 : f32
    %163 = vector.broadcast %cst_48 : f32 to vector<8x1xf32>
    %164 = arith.divf %162, %163 : vector<8x1xf32>
    %165 = vector.broadcast %164 : vector<8x1xf32> to vector<8x64xf32>
    %166 = arith.subf %160, %165 : vector<8x64xf32>
    %167 = arith.mulf %166, %166 : vector<8x64xf32>
    %cst_49 = arith.constant dense<0.000000e+00> : vector<8xf32>
    %168 = vector.multi_reduction <add>, %167, %cst_49 [1] : vector<8x64xf32> to vector<8xf32>
    %169 = vector.shape_cast %168 : vector<8xf32> to vector<8x1xf32>
    %cst_50 = arith.constant 6.400000e+01 : f32
    %170 = vector.broadcast %cst_50 : f32 to vector<8x1xf32>
    %171 = arith.divf %169, %170 : vector<8x1xf32>
    %172 = vector.broadcast %164 : vector<8x1xf32> to vector<8x64xf32>
    %173 = arith.subf %160, %172 : vector<8x64xf32>
    %cst_51 = arith.constant 9.99999974E-6 : f32
    %174 = vector.broadcast %cst_51 : f32 to vector<8x1xf32>
    %175 = arith.addf %171, %174 : vector<8x1xf32>
    %176 = math.rsqrt %175 : vector<8x1xf32>
    %177 = vector.broadcast %176 : vector<8x1xf32> to vector<8x64xf32>
    %178 = arith.mulf %173, %177 : vector<8x64xf32>
    %c0_52 = arith.constant 0 : index
    %c0_53 = arith.constant 0 : index
    %179 = vector.load %arg7[%c0_52, %c0_53] : memref<1x64xbf16, #tpu.memory_space<vmem>>, vector<1x64xbf16>
    %180 = arith.extf %179 : vector<1x64xbf16> to vector<1x64xf32>
    %181 = vector.broadcast %180 : vector<1x64xf32> to vector<8x64xf32>
    %182 = arith.mulf %178, %181 : vector<8x64xf32>
    %c0_54 = arith.constant 0 : index
    %c0_55 = arith.constant 0 : index
    %183 = vector.load %arg8[%c0_54, %c0_55] : memref<1x64xbf16, #tpu.memory_space<vmem>>, vector<1x64xbf16>
    %184 = arith.extf %183 : vector<1x64xbf16> to vector<1x64xf32>
    %185 = vector.broadcast %184 : vector<1x64xf32> to vector<8x64xf32>
    %186 = arith.addf %182, %185 : vector<8x64xf32>
    %187 = arith.truncf %186 : vector<8x64xf32> to vector<8x64xbf16>
    %c0_56 = arith.constant 0 : index
    %c0_57 = arith.constant 0 : index
    %188 = vector.load %arg9[%c0_56, %c0_57] : memref<64x128xbf16, #tpu.memory_space<vmem>>, vector<64x128xbf16>
    %cst_58 = arith.constant dense<0.000000e+00> : vector<8x128xf32>
    %189 = tpu.matmul %187, %188, %cst_58 {dimension_numbers = #tpu.dot_dimension_numbers<[1], [0], [0], [1], [0, 0, 1, 1], [], []>} : vector<8x64xbf16>, vector<64x128xbf16>, vector<8x128xf32> -> vector<8x128xf32>
    %c0_59 = arith.constant 0 : index
    %c0_60 = arith.constant 0 : index
    %190 = vector.load %arg10[%c0_59, %c0_60] : memref<1x128xbf16, #tpu.memory_space<vmem>>, vector<1x128xbf16>
    %191 = arith.extf %190 : vector<1x128xbf16> to vector<1x128xf32>
    %192 = vector.broadcast %191 : vector<1x128xf32> to vector<8x128xf32>
    %193 = arith.addf %189, %192 : vector<8x128xf32>
    %cst_61 = arith.constant 0.000000e+00 : f32
    %194 = vector.broadcast %cst_61 : f32 to vector<8x128xf32>
    %195 = arith.maximumf %193, %194 : vector<8x128xf32>
    %196 = arith.truncf %195 : vector<8x128xf32> to vector<8x128xbf16>
    %c0_62 = arith.constant 0 : index
    %c0_63 = arith.constant 0 : index
    %197 = vector.load %arg11[%c0_62, %c0_63] : memref<128x64xbf16, #tpu.memory_space<vmem>>, vector<128x64xbf16>
    %cst_64 = arith.constant dense<0.000000e+00> : vector<8x64xf32>
    %198 = tpu.matmul %196, %197, %cst_64 {dimension_numbers = #tpu.dot_dimension_numbers<[1], [0], [0], [1], [0, 0, 1, 1], [], []>} : vector<8x128xbf16>, vector<128x64xbf16>, vector<8x64xf32> -> vector<8x64xf32>
    %c0_65 = arith.constant 0 : index
    %c0_66 = arith.constant 0 : index
    %199 = vector.load %arg12[%c0_65, %c0_66] : memref<1x64xbf16, #tpu.memory_space<vmem>>, vector<1x64xbf16>
    %200 = arith.extf %199 : vector<1x64xbf16> to vector<1x64xf32>
    %201 = vector.broadcast %200 : vector<1x64xf32> to vector<8x64xf32>
    %202 = arith.addf %198, %201 : vector<8x64xf32>
    %203 = arith.addf %186, %202 : vector<8x64xf32>
    %cst_67 = arith.constant dense<0.000000e+00> : vector<8xf32>
    %204 = vector.multi_reduction <add>, %203, %cst_67 [1] : vector<8x64xf32> to vector<8xf32>
    %205 = vector.shape_cast %204 : vector<8xf32> to vector<8x1xf32>
    %cst_68 = arith.constant 6.400000e+01 : f32
    %206 = vector.broadcast %cst_68 : f32 to vector<8x1xf32>
    %207 = arith.divf %205, %206 : vector<8x1xf32>
    %208 = vector.broadcast %207 : vector<8x1xf32> to vector<8x64xf32>
    %209 = arith.subf %203, %208 : vector<8x64xf32>
    %210 = arith.mulf %209, %209 : vector<8x64xf32>
    %cst_69 = arith.constant dense<0.000000e+00> : vector<8xf32>
    %211 = vector.multi_reduction <add>, %210, %cst_69 [1] : vector<8x64xf32> to vector<8xf32>
    %212 = vector.shape_cast %211 : vector<8xf32> to vector<8x1xf32>
    %cst_70 = arith.constant 6.400000e+01 : f32
    %213 = vector.broadcast %cst_70 : f32 to vector<8x1xf32>
    %214 = arith.divf %212, %213 : vector<8x1xf32>
    %215 = vector.broadcast %207 : vector<8x1xf32> to vector<8x64xf32>
    %216 = arith.subf %203, %215 : vector<8x64xf32>
    %cst_71 = arith.constant 9.99999974E-6 : f32
    %217 = vector.broadcast %cst_71 : f32 to vector<8x1xf32>
    %218 = arith.addf %214, %217 : vector<8x1xf32>
    %219 = math.rsqrt %218 : vector<8x1xf32>
    %220 = vector.broadcast %219 : vector<8x1xf32> to vector<8x64xf32>
    %221 = arith.mulf %216, %220 : vector<8x64xf32>
    %c0_72 = arith.constant 0 : index
    %c0_73 = arith.constant 0 : index
    %222 = vector.load %arg13[%c0_72, %c0_73] : memref<1x64xbf16, #tpu.memory_space<vmem>>, vector<1x64xbf16>
    %223 = arith.extf %222 : vector<1x64xbf16> to vector<1x64xf32>
    %224 = vector.broadcast %223 : vector<1x64xf32> to vector<8x64xf32>
    %225 = arith.mulf %221, %224 : vector<8x64xf32>
    %c0_74 = arith.constant 0 : index
    %c0_75 = arith.constant 0 : index
    %226 = vector.load %arg14[%c0_74, %c0_75] : memref<1x64xbf16, #tpu.memory_space<vmem>>, vector<1x64xbf16>
    %227 = arith.extf %226 : vector<1x64xbf16> to vector<1x64xf32>
    %228 = vector.broadcast %227 : vector<1x64xf32> to vector<8x64xf32>
    %229 = arith.addf %225, %228 : vector<8x64xf32>
    %cst_76 = arith.constant dense<0.000000e+00> : vector<8xf32>
    %230 = vector.multi_reduction <add>, %229, %cst_76 [1] : vector<8x64xf32> to vector<8xf32>
    %231 = vector.shape_cast %230 : vector<8xf32> to vector<8x1xf32>
    %cst_77 = arith.constant 6.400000e+01 : f32
    %232 = vector.broadcast %cst_77 : f32 to vector<8x1xf32>
    %233 = arith.divf %231, %232 : vector<8x1xf32>
    %234 = vector.broadcast %233 : vector<8x1xf32> to vector<8x64xf32>
    %235 = arith.subf %229, %234 : vector<8x64xf32>
    %236 = arith.mulf %235, %235 : vector<8x64xf32>
    %cst_78 = arith.constant dense<0.000000e+00> : vector<8xf32>
    %237 = vector.multi_reduction <add>, %236, %cst_78 [1] : vector<8x64xf32> to vector<8xf32>
    %238 = vector.shape_cast %237 : vector<8xf32> to vector<8x1xf32>
    %cst_79 = arith.constant 6.400000e+01 : f32
    %239 = vector.broadcast %cst_79 : f32 to vector<8x1xf32>
    %240 = arith.divf %238, %239 : vector<8x1xf32>
    %241 = vector.broadcast %233 : vector<8x1xf32> to vector<8x64xf32>
    %242 = arith.subf %229, %241 : vector<8x64xf32>
    %cst_80 = arith.constant 9.99999974E-6 : f32
    %243 = vector.broadcast %cst_80 : f32 to vector<8x1xf32>
    %244 = arith.addf %240, %243 : vector<8x1xf32>
    %245 = math.rsqrt %244 : vector<8x1xf32>
    %246 = vector.broadcast %245 : vector<8x1xf32> to vector<8x64xf32>
    %247 = arith.mulf %242, %246 : vector<8x64xf32>
    %c0_81 = arith.constant 0 : index
    %c0_82 = arith.constant 0 : index
    %248 = vector.load %arg15[%c0_81, %c0_82] : memref<1x64xbf16, #tpu.memory_space<vmem>>, vector<1x64xbf16>
    %249 = arith.extf %248 : vector<1x64xbf16> to vector<1x64xf32>
    %250 = vector.broadcast %249 : vector<1x64xf32> to vector<8x64xf32>
    %251 = arith.mulf %247, %250 : vector<8x64xf32>
    %c0_83 = arith.constant 0 : index
    %c0_84 = arith.constant 0 : index
    %252 = vector.load %arg16[%c0_83, %c0_84] : memref<1x64xbf16, #tpu.memory_space<vmem>>, vector<1x64xbf16>
    %253 = arith.extf %252 : vector<1x64xbf16> to vector<1x64xf32>
    %254 = vector.broadcast %253 : vector<1x64xf32> to vector<8x64xf32>
    %255 = arith.addf %251, %254 : vector<8x64xf32>
    %256 = vector.extract_strided_slice %255 {offsets = [0, 0], sizes = [1, 64], strides = [1, 1]} : vector<8x64xf32> to vector<1x64xf32>
    %c0_85 = arith.constant 0 : index
    %c0_86 = arith.constant 0 : index
    %c0_87 = arith.constant 0 : index
    %257 = vector.load %arg17[%c0_85, %c0_86, %c0_87] : memref<1x1x64xf32, #tpu.memory_space<vmem>>, vector<1x1x64xf32>
    %258 = vector.shape_cast %257 : vector<1x1x64xf32> to vector<1x64xf32>
    %259 = vector.shape_cast %256 : vector<1x64xf32> to vector<1x1x64xf32>
    tpu.vector_store %arg17[%c0_85, %c0_86, %c0_87], %259 {strides = array<i32>} : memref<1x1x64xf32, #tpu.memory_space<vmem>>, vector<1x1x64xf32>,
    return
  }
  func.func @transform_0(%arg0: i32) -> (i32, i32, i32) {
    %c0_i32 = arith.constant 0 : i32
    %c0_i32_0 = arith.constant 0 : i32
    %c0_i32_1 = arith.constant 0 : i32
    return %arg0, %c0_i32, %c0_i32_0 : i32, i32, i32
  }
  func.func @transform_1(%arg0: i32) -> (i32, i32, i32) {
    %c0_i32 = arith.constant 0 : i32
    %c0_i32_0 = arith.constant 0 : i32
    %c0_i32_1 = arith.constant 0 : i32
    return %arg0, %c0_i32, %c0_i32_0 : i32, i32, i32
  }
  func.func @transform_2(%arg0: i32) -> (i32, i32) {
    %c0_i32 = arith.constant 0 : i32
    %c0_i32_0 = arith.constant 0 : i32
    %c0_i32_1 = arith.constant 0 : i32
    return %c0_i32, %c0_i32_0 : i32, i32
  }
  func.func @transform_3(%arg0: i32) -> (i32, i32) {
    %c0_i32 = arith.constant 0 : i32
    %c0_i32_0 = arith.constant 0 : i32
    %c0_i32_1 = arith.constant 0 : i32
    return %c0_i32, %c0_i32_0 : i32, i32
  }
  func.func @transform_4(%arg0: i32) -> (i32, i32) {
    %c0_i32 = arith.constant 0 : i32
    %c0_i32_0 = arith.constant 0 : i32
    %c0_i32_1 = arith.constant 0 : i32
    return %c0_i32, %c0_i32_0 : i32, i32
  }
  func.func @transform_5(%arg0: i32) -> (i32, i32) {
    %c0_i32 = arith.constant 0 : i32
    %c0_i32_0 = arith.constant 0 : i32
    %c0_i32_1 = arith.constant 0 : i32
    return %c0_i32, %c0_i32_0 : i32, i32
  }
  func.func @transform_6(%arg0: i32) -> (i32, i32) {
    %c0_i32 = arith.constant 0 : i32
    %c0_i32_0 = arith.constant 0 : i32
    %c0_i32_1 = arith.constant 0 : i32
    return %c0_i32, %c0_i32_0 : i32, i32
  }
  func.func @transform_7(%arg0: i32) -> (i32, i32) {
    %c0_i32 = arith.constant 0 : i32
    %c0_i32_0 = arith.constant 0 : i32
    %c0_i32_1 = arith.constant 0 : i32
    return %c0_i32, %c0_i32_0 : i32, i32
  }
  func.func @transform_8(%arg0: i32) -> (i32, i32) {
    %c0_i32 = arith.constant 0 : i32
    %c0_i32_0 = arith.constant 0 : i32
    %c0_i32_1 = arith.constant 0 : i32
    return %c0_i32, %c0_i32_0 : i32, i32
  }
  func.func @transform_9(%arg0: i32) -> (i32, i32) {
    %c0_i32 = arith.constant 0 : i32
    %c0_i32_0 = arith.constant 0 : i32
    %c0_i32_1 = arith.constant 0 : i32
    return %c0_i32, %c0_i32_0 : i32, i32
  }
  func.func @transform_10(%arg0: i32) -> (i32, i32) {
    %c0_i32 = arith.constant 0 : i32
    %c0_i32_0 = arith.constant 0 : i32
    %c0_i32_1 = arith.constant 0 : i32
    return %c0_i32, %c0_i32_0 : i32, i32
  }
  func.func @transform_11(%arg0: i32) -> (i32, i32) {
    %c0_i32 = arith.constant 0 : i32
    %c0_i32_0 = arith.constant 0 : i32
    %c0_i32_1 = arith.constant 0 : i32
    return %c0_i32, %c0_i32_0 : i32, i32
  }
  func.func @transform_12(%arg0: i32) -> (i32, i32) {
    %c0_i32 = arith.constant 0 : i32
    %c0_i32_0 = arith.constant 0 : i32
    %c0_i32_1 = arith.constant 0 : i32
    return %c0_i32, %c0_i32_0 : i32, i32
  }
  func.func @transform_13(%arg0: i32) -> (i32, i32) {
    %c0_i32 = arith.constant 0 : i32
    %c0_i32_0 = arith.constant 0 : i32
    %c0_i32_1 = arith.constant 0 : i32
    return %c0_i32, %c0_i32_0 : i32, i32
  }
  func.func @transform_14(%arg0: i32) -> (i32, i32) {
    %c0_i32 = arith.constant 0 : i32
    %c0_i32_0 = arith.constant 0 : i32
    %c0_i32_1 = arith.constant 0 : i32
    return %c0_i32, %c0_i32_0 : i32, i32
  }
  func.func @transform_15(%arg0: i32) -> (i32, i32) {
    %c0_i32 = arith.constant 0 : i32
    %c0_i32_0 = arith.constant 0 : i32
    %c0_i32_1 = arith.constant 0 : i32
    return %c0_i32, %c0_i32_0 : i32, i32
  }
  func.func @transform_16(%arg0: i32) -> (i32, i32, i32) {
    %c0_i32 = arith.constant 0 : i32
    %c0_i32_0 = arith.constant 0 : i32
    %c0_i32_1 = arith.constant 0 : i32
    return %arg0, %c0_i32, %c0_i32_0 : i32, i32, i32
  }
}

</mosaic_0001>

<llo_original>
// kernel: transformer_encoder_forward.1
$region0: #{transformer_encoder_forward.1}
  #allocation0 [shape = 'u32[]', space=smem, size = 0x4, offset = 0x4, fixed_abs, tag = 'smem constant byte address 0x4 - core index']
  #allocation1 [shape = 'u32[144,128]{1,0:T(1,128)}', space=vmem, size = 0x12000, scoped, tag = 'internal scratch']
  %s0 = inlined_call_operand.vmem [shape: bf16[2,8,64], index: 0, kind: input, shape index: {}]
  %s1 = inlined_call_operand.vmem [shape: f32[2,1,8], index: 1, kind: input, shape index: {}]
  %s2 = inlined_call_operand.vmem [shape: bf16[64,192], index: 2, kind: input, shape index: {}]
  %s3 = inlined_call_operand.vmem [shape: bf16[1,192], index: 3, kind: input, shape index: {}]
  %s4 = inlined_call_operand.vmem [shape: bf16[64,64], index: 4, kind: input, shape index: {}]
  %s5 = inlined_call_operand.vmem [shape: bf16[1,64], index: 5, kind: input, shape index: {}]
  %s6 = inlined_call_operand.vmem [shape: bf16[1,64], index: 6, kind: input, shape index: {}]
  %s7 = inlined_call_operand.vmem [shape: bf16[1,64], index: 7, kind: input, shape index: {}]
  %s8 = inlined_call_operand.vmem [shape: bf16[64,128], index: 8, kind: input, shape index: {}]
  %s9 = inlined_call_operand.vmem [shape: bf16[1,128], index: 9, kind: input, shape index: {}]
  %s10 = inlined_call_operand.vmem [shape: bf16[128,64], index: 10, kind: input, shape index: {}]
  %s11 = inlined_call_operand.vmem [shape: bf16[1,64], index: 11, kind: input, shape index: {}]
  %s12 = inlined_call_operand.vmem [shape: bf16[1,64], index: 12, kind: input, shape index: {}]
  %s13 = inlined_call_operand.vmem [shape: bf16[1,64], index: 13, kind: input, shape index: {}]
  %s14 = inlined_call_operand.vmem [shape: bf16[1,64], index: 14, kind: input, shape index: {}]
  %s15 = inlined_call_operand.vmem [shape: bf16[1,64], index: 15, kind: input, shape index: {}]
  %s16 = inlined_call_operand.hbm [shape: f32[2,1,64], index: 16, kind: output, shape index: {}]
  %s17 = sld [smem:[#allocation0]]
  $region97: #{transformer_encoder_forward.1} parent=0
    _
  %s19 = ssub.s32 1, %s17
  %s20 = scalar_select 0, %s19, %s17
  $region1: #{transformer_encoder_forward.1} parent=0
    #allocation2 [shape = 'u8[1024]{0}', space=vmem, size = 0x400, scoped, tag = 'output window, operand 0']
    #allocation3 [shape = 's32[2]{0}', space=sflag, size = 0x8, scoped, tag = 'scoped memory for transformer_encoder_forward.1']
    %21 = vsyncpa [#allocation3], 0
    %s22 = scalar_lea.sflag [#allocation3], 1
    %23 = vsyncpa %s22, 0
    loop: start=0, step=1, limit=4
    $region2: #{transformer_encoder_forward.1} parent=1 // loop_pre_header
      _
    $region3: #{transformer_encoder_forward.1} parent=1 // loop_header
      %s25 = sphi 0, %s29
      %p26 = scmp.ge.s32.totalorder %s25, 4
      %s35 = sphi 0, %s37
      %s38 = sphi 0, %s35
      %s39 = sphi 0, %s38
      %s55 = sphi 0, %s39
      %s61 = sphi 0, %s63
      %s64 = sphi 0, %s61
      %s65 = sphi 0, %s64
      %s81 = sphi 0, %s65
      %s85 = sphi 0, %s85
      %s87 = sphi 0, %s85
      %s88 = sphi 0, %s87
      %s102 = sphi 0, %s88
      %s106 = sphi 0, %s106
      %s108 = sphi 0, %s106
      %s109 = sphi 0, %s108
      %s123 = sphi 0, %s109
      %s127 = sphi 0, %s127
      %s129 = sphi 0, %s127
      %s130 = sphi 0, %s129
      %s144 = sphi 0, %s130
      %s148 = sphi 0, %s148
      %s150 = sphi 0, %s148
      %s151 = sphi 0, %s150
      %s165 = sphi 0, %s151
      %s169 = sphi 0, %s169
      %s171 = sphi 0, %s169
      %s172 = sphi 0, %s171
      %s186 = sphi 0, %s172
      %s190 = sphi 0, %s190
      %s192 = sphi 0, %s190
      %s193 = sphi 0, %s192
      %s207 = sphi 0, %s193
      %s211 = sphi 0, %s211
      %s213 = sphi 0, %s211
      %s214 = sphi 0, %s213
      %s228 = sphi 0, %s214
      %s232 = sphi 0, %s232
      %s234 = sphi 0, %s232
      %s235 = sphi 0, %s234
      %s249 = sphi 0, %s235
      %s253 = sphi 0, %s253
      %s255 = sphi 0, %s253
      %s256 = sphi 0, %s255
      %s270 = sphi 0, %s256
      %s274 = sphi 0, %s274
      %s276 = sphi 0, %s274
      %s277 = sphi 0, %s276
      %s291 = sphi 0, %s277
      %s295 = sphi 0, %s295
      %s297 = sphi 0, %s295
      %s298 = sphi 0, %s297
      %s312 = sphi 0, %s298
      %s316 = sphi 0, %s316
      %s318 = sphi 0, %s316
      %s319 = sphi 0, %s318
      %s333 = sphi 0, %s319
      %s337 = sphi 0, %s337
      %s339 = sphi 0, %s337
      %s340 = sphi 0, %s339
      %s354 = sphi 0, %s340
      %s358 = sphi 0, %s358
      %s360 = sphi 0, %s358
      %s361 = sphi 0, %s360
      %s375 = sphi 0, %s361
      %s381 = sphi 0, %s383
      %s384 = sphi 0, %s381
      %s385 = sphi 0, %s384
      %s401 = sphi 0, %s385
    $region4: #{transformer_encoder_forward.1} parent=1 // loop_header_branch
      %28 = sbr.rel (%p26) target = $region8
    $region5: #{transformer_encoder_forward.1} parent=1 // loop_body
      %s30 = ssub.s32 %s25, 1
      %s31 = ssub.s32 %s25, 2
      %s32 = sadd.s32 %s25, 1
      %s33 = ssub.s32 %s25, %s32
      %p34 = scmp.eq.s32.totalorder %s33, 0
      %s36 = sadd.s32 %s35, 1
      %s37 = scalar_select %p34, %s35, %s36
      %p40 = pneg %p34
      %p41 = scmp.eq.s32.totalorder %s25, 1
      %p42 = por %p40, %p41
      %p43 = scmp.ne.s32.totalorder %s35, %s38
      %p44 = scmp.eq.s32.totalorder %s25, 0
      %p45 = por %p43, %p44
      %p46 = scmp.ne.s32.totalorder %s35, %s38
      %p47 = scmp.eq.s32.totalorder %s30, 1
      %p48 = por %p46, %p47
      %p49 = scmp.ne.s32.totalorder %s38, %s39
      %p50 = scmp.eq.s32.totalorder %s30, 0
      %p51 = por %p49, %p50
      %p52 = scmp.ne.s32.totalorder %s38, %s39
      %p53 = scmp.eq.s32.totalorder %s31, 1
      %p54 = por %p52, %p53
      %p56 = scmp.ne.s32.totalorder %s39, %s55
      %p57 = scmp.eq.s32.totalorder %s31, 0
      %p58 = por %p56, %p57
      %s59 = ssub.s32 %s25, %s32
      %p60 = scmp.eq.s32.totalorder %s59, 0
      %s62 = sadd.s32 %s61, 1
      %s63 = scalar_select %p60, %s61, %s62
      %p66 = pneg %p60
      %p67 = scmp.eq.s32.totalorder %s25, 1
      %p68 = por %p66, %p67
      %p69 = scmp.ne.s32.totalorder %s61, %s64
      %p70 = scmp.eq.s32.totalorder %s25, 0
      %p71 = por %p69, %p70
      %p72 = scmp.ne.s32.totalorder %s61, %s64
      %p73 = scmp.eq.s32.totalorder %s30, 1
      %p74 = por %p72, %p73
      %p75 = scmp.ne.s32.totalorder %s64, %s65
      %p76 = scmp.eq.s32.totalorder %s30, 0
      %p77 = por %p75, %p76
      %p78 = scmp.ne.s32.totalorder %s64, %s65
      %p79 = scmp.eq.s32.totalorder %s31, 1
      %p80 = por %p78, %p79
      %p82 = scmp.ne.s32.totalorder %s65, %s81
      %p83 = scmp.eq.s32.totalorder %s31, 0
      %p84 = por %p82, %p83
      %s86 = sadd.s32 %s85, 1
      %p89 = scmp.eq.s32.totalorder %s25, 1
      %p90 = scmp.ne.s32.totalorder %s85, %s87
      %p91 = scmp.eq.s32.totalorder %s25, 0
      %p92 = por %p90, %p91
      %p93 = scmp.ne.s32.totalorder %s85, %s87
      %p94 = scmp.eq.s32.totalorder %s30, 1
      %p95 = por %p93, %p94
      %p96 = scmp.ne.s32.totalorder %s87, %s88
      %p97 = scmp.eq.s32.totalorder %s30, 0
      %p98 = por %p96, %p97
      %p99 = scmp.ne.s32.totalorder %s87, %s88
      %p100 = scmp.eq.s32.totalorder %s31, 1
      %p101 = por %p99, %p100
      %p103 = scmp.ne.s32.totalorder %s88, %s102
      %p104 = scmp.eq.s32.totalorder %s31, 0
      %p105 = por %p103, %p104
      %s107 = sadd.s32 %s106, 1
      %p110 = scmp.eq.s32.totalorder %s25, 1
      %p111 = scmp.ne.s32.totalorder %s106, %s108
      %p112 = scmp.eq.s32.totalorder %s25, 0
      %p113 = por %p111, %p112
      %p114 = scmp.ne.s32.totalorder %s106, %s108
      %p115 = scmp.eq.s32.totalorder %s30, 1
      %p116 = por %p114, %p115
      %p117 = scmp.ne.s32.totalorder %s108, %s109
      %p118 = scmp.eq.s32.totalorder %s30, 0
      %p119 = por %p117, %p118
      %p120 = scmp.ne.s32.totalorder %s108, %s109
      %p121 = scmp.eq.s32.totalorder %s31, 1
      %p122 = por %p120, %p121
      %p124 = scmp.ne.s32.totalorder %s109, %s123
      %p125 = scmp.eq.s32.totalorder %s31, 0
      %p126 = por %p124, %p125
      %s128 = sadd.s32 %s127, 1
      %p131 = scmp.eq.s32.totalorder %s25, 1
      %p132 = scmp.ne.s32.totalorder %s127, %s129
      %p133 = scmp.eq.s32.totalorder %s25, 0
      %p134 = por %p132, %p133
      %p135 = scmp.ne.s32.totalorder %s127, %s129
      %p136 = scmp.eq.s32.totalorder %s30, 1
      %p137 = por %p135, %p136
      %p138 = scmp.ne.s32.totalorder %s129, %s130
      %p139 = scmp.eq.s32.totalorder %s30, 0
      %p140 = por %p138, %p139
      %p141 = scmp.ne.s32.totalorder %s129, %s130
      %p142 = scmp.eq.s32.totalorder %s31, 1
      %p143 = por %p141, %p142
      %p145 = scmp.ne.s32.totalorder %s130, %s144
      %p146 = scmp.eq.s32.totalorder %s31, 0
      %p147 = por %p145, %p146
      %s149 = sadd.s32 %s148, 1
      %p152 = scmp.eq.s32.totalorder %s25, 1
      %p153 = scmp.ne.s32.totalorder %s148, %s150
      %p154 = scmp.eq.s32.totalorder %s25, 0
      %p155 = por %p153, %p154
      %p156 = scmp.ne.s32.totalorder %s148, %s150
      %p157 = scmp.eq.s32.totalorder %s30, 1
      %p158 = por %p156, %p157
      %p159 = scmp.ne.s32.totalorder %s150, %s151
      %p160 = scmp.eq.s32.totalorder %s30, 0
      %p161 = por %p159, %p160
      %p162 = scmp.ne.s32.totalorder %s150, %s151
      %p163 = scmp.eq.s32.totalorder %s31, 1
      %p164 = por %p162, %p163
      %p166 = scmp.ne.s32.totalorder %s151, %s165
      %p167 = scmp.eq.s32.totalorder %s31, 0
      %p168 = por %p166, %p167
      %s170 = sadd.s32 %s169, 1
      %p173 = scmp.eq.s32.totalorder %s25, 1
      %p174 = scmp.ne.s32.totalorder %s169, %s171
      %p175 = scmp.eq.s32.totalorder %s25, 0
      %p176 = por %p174, %p175
      %p177 = scmp.ne.s32.totalorder %s169, %s171
      %p178 = scmp.eq.s32.totalorder %s30, 1
      %p179 = por %p177, %p178
      %p180 = scmp.ne.s32.totalorder %s171, %s172
      %p181 = scmp.eq.s32.totalorder %s30, 0
      %p182 = por %p180, %p181
      %p183 = scmp.ne.s32.totalorder %s171, %s172
      %p184 = scmp.eq.s32.totalorder %s31, 1
      %p185 = por %p183, %p184
      %p187 = scmp.ne.s32.totalorder %s172, %s186
      %p188 = scmp.eq.s32.totalorder %s31, 0
      %p189 = por %p187, %p188
      %s191 = sadd.s32 %s190, 1
      %p194 = scmp.eq.s32.totalorder %s25, 1
      %p195 = scmp.ne.s32.totalorder %s190, %s192
      %p196 = scmp.eq.s32.totalorder %s25, 0
      %p197 = por %p195, %p196
      %p198 = scmp.ne.s32.totalorder %s190, %s192
      %p199 = scmp.eq.s32.totalorder %s30, 1
      %p200 = por %p198, %p199
      %p201 = scmp.ne.s32.totalorder %s192, %s193
      %p202 = scmp.eq.s32.totalorder %s30, 0
      %p203 = por %p201, %p202
      %p204 = scmp.ne.s32.totalorder %s192, %s193
      %p205 = scmp.eq.s32.totalorder %s31, 1
      %p206 = por %p204, %p205
      %p208 = scmp.ne.s32.totalorder %s193, %s207
      %p209 = scmp.eq.s32.totalorder %s31, 0
      %p210 = por %p208, %p209
      %s212 = sadd.s32 %s211, 1
      %p215 = scmp.eq.s32.totalorder %s25, 1
      %p216 = scmp.ne.s32.totalorder %s211, %s213
      %p217 = scmp.eq.s32.totalorder %s25, 0
      %p218 = por %p216, %p217
      %p219 = scmp.ne.s32.totalorder %s211, %s213
      %p220 = scmp.eq.s32.totalorder %s30, 1
      %p221 = por %p219, %p220
      %p222 = scmp.ne.s32.totalorder %s213, %s214
      %p223 = scmp.eq.s32.totalorder %s30, 0
      %p224 = por %p222, %p223
      %p225 = scmp.ne.s32.totalorder %s213, %s214
      %p226 = scmp.eq.s32.totalorder %s31, 1
      %p227 = por %p225, %p226
      %p229 = scmp.ne.s32.totalorder %s214, %s228
      %p230 = scmp.eq.s32.totalorder %s31, 0
      %p231 = por %p229, %p230
      %s233 = sadd.s32 %s232, 1
      %p236 = scmp.eq.s32.totalorder %s25, 1
      %p237 = scmp.ne.s32.totalorder %s232, %s234
      %p238 = scmp.eq.s32.totalorder %s25, 0
      %p239 = por %p237, %p238
      %p240 = scmp.ne.s32.totalorder %s232, %s234
      %p241 = scmp.eq.s32.totalorder %s30, 1
      %p242 = por %p240, %p241
      %p243 = scmp.ne.s32.totalorder %s234, %s235
      %p244 = scmp.eq.s32.totalorder %s30, 0
      %p245 = por %p243, %p244
      %p246 = scmp.ne.s32.totalorder %s234, %s235
      %p247 = scmp.eq.s32.totalorder %s31, 1
      %p248 = por %p246, %p247
      %p250 = scmp.ne.s32.totalorder %s235, %s249
      %p251 = scmp.eq.s32.totalorder %s31, 0
      %p252 = por %p250, %p251
      %s254 = sadd.s32 %s253, 1
      %p257 = scmp.eq.s32.totalorder %s25, 1
      %p258 = scmp.ne.s32.totalorder %s253, %s255
      %p259 = scmp.eq.s32.totalorder %s25, 0
      %p260 = por %p258, %p259
      %p261 = scmp.ne.s32.totalorder %s253, %s255
      %p262 = scmp.eq.s32.totalorder %s30, 1
      %p263 = por %p261, %p262
      %p264 = scmp.ne.s32.totalorder %s255, %s256
      %p265 = scmp.eq.s32.totalorder %s30, 0
      %p266 = por %p264, %p265
      %p267 = scmp.ne.s32.totalorder %s255, %s256
      %p268 = scmp.eq.s32.totalorder %s31, 1
      %p269 = por %p267, %p268
      %p271 = scmp.ne.s32.totalorder %s256, %s270
      %p272 = scmp.eq.s32.totalorder %s31, 0
      %p273 = por %p271, %p272
      %s275 = sadd.s32 %s274, 1
      %p278 = scmp.eq.s32.totalorder %s25, 1
      %p279 = scmp.ne.s32.totalorder %s274, %s276
      %p280 = scmp.eq.s32.totalorder %s25, 0
      %p281 = por %p279, %p280
      %p282 = scmp.ne.s32.totalorder %s274, %s276
      %p283 = scmp.eq.s32.totalorder %s30, 1
      %p284 = por %p282, %p283
      %p285 = scmp.ne.s32.totalorder %s276, %s277
      %p286 = scmp.eq.s32.totalorder %s30, 0
      %p287 = por %p285, %p286
      %p288 = scmp.ne.s32.totalorder %s276, %s277
      %p289 = scmp.eq.s32.totalorder %s31, 1
      %p290 = por %p288, %p289
      %p292 = scmp.ne.s32.totalorder %s277, %s291
      %p293 = scmp.eq.s32.totalorder %s31, 0
      %p294 = por %p292, %p293
      %s296 = sadd.s32 %s295, 1
      %p299 = scmp.eq.s32.totalorder %s25, 1
      %p300 = scmp.ne.s32.totalorder %s295, %s297
      %p301 = scmp.eq.s32.totalorder %s25, 0
      %p302 = por %p300, %p301
      %p303 = scmp.ne.s32.totalorder %s295, %s297
      %p304 = scmp.eq.s32.totalorder %s30, 1
      %p305 = por %p303, %p304
      %p306 = scmp.ne.s32.totalorder %s297, %s298
      %p307 = scmp.eq.s32.totalorder %s30, 0
      %p308 = por %p306, %p307
      %p309 = scmp.ne.s32.totalorder %s297, %s298
      %p310 = scmp.eq.s32.totalorder %s31, 1
      %p311 = por %p309, %p310
      %p313 = scmp.ne.s32.totalorder %s298, %s312
      %p314 = scmp.eq.s32.totalorder %s31, 0
      %p315 = por %p313, %p314
      %s317 = sadd.s32 %s316, 1
      %p320 = scmp.eq.s32.totalorder %s25, 1
      %p321 = scmp.ne.s32.totalorder %s316, %s318
      %p322 = scmp.eq.s32.totalorder %s25, 0
      %p323 = por %p321, %p322
      %p324 = scmp.ne.s32.totalorder %s316, %s318
      %p325 = scmp.eq.s32.totalorder %s30, 1
      %p326 = por %p324, %p325
      %p327 = scmp.ne.s32.totalorder %s318, %s319
      %p328 = scmp.eq.s32.totalorder %s30, 0
      %p329 = por %p327, %p328
      %p330 = scmp.ne.s32.totalorder %s318, %s319
      %p331 = scmp.eq.s32.totalorder %s31, 1
      %p332 = por %p330, %p331
      %p334 = scmp.ne.s32.totalorder %s319, %s333
      %p335 = scmp.eq.s32.totalorder %s31, 0
      %p336 = por %p334, %p335
      %s338 = sadd.s32 %s337, 1
      %p341 = scmp.eq.s32.totalorder %s25, 1
      %p342 = scmp.ne.s32.totalorder %s337, %s339
      %p343 = scmp.eq.s32.totalorder %s25, 0
      %p344 = por %p342, %p343
      %p345 = scmp.ne.s32.totalorder %s337, %s339
      %p346 = scmp.eq.s32.totalorder %s30, 1
      %p347 = por %p345, %p346
      %p348 = scmp.ne.s32.totalorder %s339, %s340
      %p349 = scmp.eq.s32.totalorder %s30, 0
      %p350 = por %p348, %p349
      %p351 = scmp.ne.s32.totalorder %s339, %s340
      %p352 = scmp.eq.s32.totalorder %s31, 1
      %p353 = por %p351, %p352
      %p355 = scmp.ne.s32.totalorder %s340, %s354
      %p356 = scmp.eq.s32.totalorder %s31, 0
      %p357 = por %p355, %p356
      %s359 = sadd.s32 %s358, 1
      %p362 = scmp.eq.s32.totalorder %s25, 1
      %p363 = scmp.ne.s32.totalorder %s358, %s360
      %p364 = scmp.eq.s32.totalorder %s25, 0
      %p365 = por %p363, %p364
      %p366 = scmp.ne.s32.totalorder %s358, %s360
      %p367 = scmp.eq.s32.totalorder %s30, 1
      %p368 = por %p366, %p367
      %p369 = scmp.ne.s32.totalorder %s360, %s361
      %p370 = scmp.eq.s32.totalorder %s30, 0
      %p371 = por %p369, %p370
      %p372 = scmp.ne.s32.totalorder %s360, %s361
      %p373 = scmp.eq.s32.totalorder %s31, 1
      %p374 = por %p372, %p373
      %p376 = scmp.ne.s32.totalorder %s361, %s375
      %p377 = scmp.eq.s32.totalorder %s31, 0
      %p378 = por %p376, %p377
      %s379 = ssub.s32 %s25, %s32
      %p380 = scmp.eq.s32.totalorder %s379, 0
      %s382 = sadd.s32 %s381, 1
      %s383 = scalar_select %p380, %s381, %s382
      %p386 = pneg %p380
      %p387 = scmp.eq.s32.totalorder %s25, 1
      %p388 = por %p386, %p387
      %p389 = scmp.ne.s32.totalorder %s381, %s384
      %p390 = scmp.eq.s32.totalorder %s25, 0
      %p391 = por %p389, %p390
      %p392 = scmp.ne.s32.totalorder %s381, %s384
      %p393 = scmp.eq.s32.totalorder %s30, 1
      %p394 = por %p392, %p393
      %p395 = scmp.ne.s32.totalorder %s384, %s385
      %p396 = scmp.eq.s32.totalorder %s30, 0
      %p397 = por %p395, %p396
      %p398 = scmp.ne.s32.totalorder %s384, %s385
      %p399 = scmp.eq.s32.totalorder %s31, 1
      %p400 = por %p398, %p399
      %p402 = scmp.ne.s32.totalorder %s385, %s401
      %p403 = scmp.eq.s32.totalorder %s31, 0
      %p404 = por %p402, %p403
      %p405 = scmp.le.s32.totalorder 1, %s25
      %p406 = scmp.lt.s32.totalorder %s25, 3
      %p407 = pnand %p405, %p406
      %p408 = pneg %p407
      // Predicated region
      $region9: #{transformer_encoder_forward.1} parent=5 // pred_check
        _
      $region10: #{transformer_encoder_forward.1} parent=5 // pred_check_branch
        %410 = sbr.rel (%p407) target = $region12
      $region11: #{transformer_encoder_forward.1} parent=5 // pred_region
        %s411 = ssub.s32 %s25, 1
        // Predicated region
        $region13: #{transformer_encoder_forward.1} parent=11 // pred_check
          %p412 = pneg %p98
        $region14: #{transformer_encoder_forward.1} parent=11 // pred_check_branch
          %414 = sbr.rel (%p412) target = $region16
        $region15: #{transformer_encoder_forward.1} parent=11 // pred_region
          _
        $region16: #{transformer_encoder_forward.1} parent=11 // pred_fallthru
          _
        // Predicated region
        $region17: #{transformer_encoder_forward.1} parent=11 // pred_check
          %p415 = pneg %p119
        $region18: #{transformer_encoder_forward.1} parent=11 // pred_check_branch
          %417 = sbr.rel (%p415) target = $region20
        $region19: #{transformer_encoder_forward.1} parent=11 // pred_region
          _
        $region20: #{transformer_encoder_forward.1} parent=11 // pred_fallthru
          _
        // Predicated region
        $region21: #{transformer_encoder_forward.1} parent=11 // pred_check
          %p418 = pneg %p140
        $region22: #{transformer_encoder_forward.1} parent=11 // pred_check_branch
          %420 = sbr.rel (%p418) target = $region24
        $region23: #{transformer_encoder_forward.1} parent=11 // pred_region
          _
        $region24: #{transformer_encoder_forward.1} parent=11 // pred_fallthru
          _
        // Predicated region
        $region25: #{transformer_encoder_forward.1} parent=11 // pred_check
          %p421 = pneg %p161
        $region26: #{transformer_encoder_forward.1} parent=11 // pred_check_branch
          %423 = sbr.rel (%p421) target = $region28
        $region27: #{transformer_encoder_forward.1} parent=11 // pred_region
          _
        $region28: #{transformer_encoder_forward.1} parent=11 // pred_fallthru
          _
        // Predicated region
        $region29: #{transformer_encoder_forward.1} parent=11 // pred_check
          %p424 = pneg %p182
        $region30: #{transformer_encoder_forward.1} parent=11 // pred_check_branch
          %426 = sbr.rel (%p424) target = $region32
        $region31: #{transformer_encoder_forward.1} parent=11 // pred_region
          _
        $region32: #{transformer_encoder_forward.1} parent=11 // pred_fallthru
          _
        // Predicated region
        $region33: #{transformer_encoder_forward.1} parent=11 // pred_check
          %p427 = pneg %p203
        $region34: #{transformer_encoder_forward.1} parent=11 // pred_check_branch
          %429 = sbr.rel (%p427) target = $region36
        $region35: #{transformer_encoder_forward.1} parent=11 // pred_region
          _
        $region36: #{transformer_encoder_forward.1} parent=11 // pred_fallthru
          _
        // Predicated region
        $region37: #{transformer_encoder_forward.1} parent=11 // pred_check
          %p430 = pneg %p224
        $region38: #{transformer_encoder_forward.1} parent=11 // pred_check_branch
          %432 = sbr.rel (%p430) target = $region40
        $region39: #{transformer_encoder_forward.1} parent=11 // pred_region
          _
        $region40: #{transformer_encoder_forward.1} parent=11 // pred_fallthru
          _
        // Predicated region
        $region41: #{transformer_encoder_forward.1} parent=11 // pred_check
          %p433 = pneg %p245
        $region42: #{transformer_encoder_forward.1} parent=11 // pred_check_branch
          %435 = sbr.rel (%p433) target = $region44
        $region43: #{transformer_encoder_forward.1} parent=11 // pred_region
          _
        $region44: #{transformer_encoder_forward.1} parent=11 // pred_fallthru
          _
        // Predicated region
        $region45: #{transformer_encoder_forward.1} parent=11 // pred_check
          %p436 = pneg %p266
        $region46: #{transformer_encoder_forward.1} parent=11 // pred_check_branch
          %438 = sbr.rel (%p436) target = $region48
        $region47: #{transformer_encoder_forward.1} parent=11 // pred_region
          _
        $region48: #{transformer_encoder_forward.1} parent=11 // pred_fallthru
          _
        // Predicated region
        $region49: #{transformer_encoder_forward.1} parent=11 // pred_check
          %p439 = pneg %p287
        $region50: #{transformer_encoder_forward.1} parent=11 // pred_check_branch
          %441 = sbr.rel (%p439) target = $region52
        $region51: #{transformer_encoder_forward.1} parent=11 // pred_region
          _
        $region52: #{transformer_encoder_forward.1} parent=11 // pred_fallthru
          _
        // Predicated region
        $region53: #{transformer_encoder_forward.1} parent=11 // pred_check
          %p442 = pneg %p308
        $region54: #{transformer_encoder_forward.1} parent=11 // pred_check_branch
          %444 = sbr.rel (%p442) target = $region56
        $region55: #{transformer_encoder_forward.1} parent=11 // pred_region
          _
        $region56: #{transformer_encoder_forward.1} parent=11 // pred_fallthru
          _
        // Predicated region
        $region57: #{transformer_encoder_forward.1} parent=11 // pred_check
          %p445 = pneg %p329
        $region58: #{transformer_encoder_forward.1} parent=11 // pred_check_branch
          %447 = sbr.rel (%p445) target = $region60
        $region59: #{transformer_encoder_forward.1} parent=11 // pred_region
          _
        $region60: #{transformer_encoder_forward.1} parent=11 // pred_fallthru
          _
        // Predicated region
        $region61: #{transformer_encoder_forward.1} parent=11 // pred_check
          %p448 = pneg %p350
        $region62: #{transformer_encoder_forward.1} parent=11 // pred_check_branch
          %450 = sbr.rel (%p448) target = $region64
        $region63: #{transformer_encoder_forward.1} parent=11 // pred_region
          _
        $region64: #{transformer_encoder_forward.1} parent=11 // pred_fallthru
          _
        // Predicated region
        $region65: #{transformer_encoder_forward.1} parent=11 // pred_check
          %p451 = pneg %p371
        $region66: #{transformer_encoder_forward.1} parent=11 // pred_check_branch
          %453 = sbr.rel (%p451) target = $region68
        $region67: #{transformer_encoder_forward.1} parent=11 // pred_region
          _
        $region68: #{transformer_encoder_forward.1} parent=11 // pred_fallthru
          _
      $region12: #{transformer_encoder_forward.1} parent=5 // pred_fallthru
        _
      %p454 = scmp.lt.s32.totalorder %s25, 2
      // Predicated region
      $region69: #{transformer_encoder_forward.1} parent=5 // pred_check
        %p455 = pneg %p454
      $region70: #{transformer_encoder_forward.1} parent=5 // pred_check_branch
        %457 = sbr.rel (%p455) target = $region72
      $region71: #{transformer_encoder_forward.1} parent=5 // pred_region
        // Predicated region
        $region73: #{transformer_encoder_forward.1} parent=71 // pred_check
          %p458 = pneg %p45
        $region74: #{transformer_encoder_forward.1} parent=71 // pred_check_branch
          %460 = sbr.rel (%p458) target = $region76
        $region75: #{transformer_encoder_forward.1} parent=71 // pred_region
          %p461 = scmp.lt.s32.totalorder %s25, 1
          %s462 = scalar_select %p461, %s25, 1
          %s463 = smul.addr %s462, 4
          %s464 = scalar_lea.vmem %s0, %s463
        $region76: #{transformer_encoder_forward.1} parent=71 // pred_fallthru
          _
        // Predicated region
        $region77: #{transformer_encoder_forward.1} parent=71 // pred_check
          %p465 = pneg %p71
        $region78: #{transformer_encoder_forward.1} parent=71 // pred_check_branch
          %467 = sbr.rel (%p465) target = $region80
        $region79: #{transformer_encoder_forward.1} parent=71 // pred_region
          %p468 = scmp.lt.s32.totalorder %s25, 1
          %s469 = scalar_select %p468, %s25, 1
          %s470 = scalar_lea.vmem %s1, %s469
        $region80: #{transformer_encoder_forward.1} parent=71 // pred_fallthru
          _
      $region72: #{transformer_encoder_forward.1} parent=5 // pred_fallthru
        _
      %p471 = scmp.le.s32.totalorder 1, %s25
      %p472 = scmp.lt.s32.totalorder %s25, 3
      %p473 = pnand %p471, %p472
      %p474 = pneg %p473
      // Predicated region
      $region81: #{transformer_encoder_forward.1} parent=5 // pred_check
        _
      $region82: #{transformer_encoder_forward.1} parent=5 // pred_check_branch
        %476 = sbr.rel (%p473) target = $region84
      $region83: #{transformer_encoder_forward.1} parent=5 // pred_region
        %s477 = ssub.s32 %s25, 1
        %p478 = scmp.lt.s32.totalorder %s30, 1
        %s479 = scalar_select %p478, %s30, 1
        %s480 = smul.addr %s479, 4
        %s481 = scalar_lea.vmem %s0, %s480
        %p482 = pneg %p51
        %p483 = pneg %p48
        %p484 = scmp.lt.s32.totalorder %s30, 1
        %s485 = scalar_select %p484, %s30, 1
        %s486 = scalar_lea.vmem %s1, %s485
        %p487 = pneg %p77
        %p488 = pneg %p74
        %p489 = pneg %p98
        %p490 = pneg %p95
        %p491 = pneg %p119
        %p492 = pneg %p116
        %p493 = pneg %p140
        %p494 = pneg %p137
        %p495 = pneg %p161
        %p496 = pneg %p158
        %p497 = pneg %p182
        %p498 = pneg %p179
        %p499 = pneg %p203
        %p500 = pneg %p200
        %p501 = pneg %p224
        %p502 = pneg %p221
        %p503 = pneg %p245
        %p504 = pneg %p242
        %p505 = pneg %p266
        %p506 = pneg %p263
        %p507 = pneg %p287
        %p508 = pneg %p284
        %p509 = pneg %p308
        %p510 = pneg %p305
        %p511 = pneg %p329
        %p512 = pneg %p326
        %p513 = pneg %p350
        %p514 = pneg %p347
        %p515 = pneg %p371
        %p516 = pneg %p368
        %p517 = pneg %p397
        %p518 = pneg %p394
        %s519 = sand.u32 %s384, 1
        %s520 = scalar_lea.sflag [#allocation3], %s519
        %s521 = sand.u32 %s384, 1
        %s522 = scalar_lea.vmem [#allocation2], %s521
        %p523 = scmp.lt.s32.totalorder %s30, 1
        %s524 = scalar_select %p523, %s30, 1
        %s525 = smul.addr %s524, 4
        %s526 = scalar_lea.vmem %s0, %s525
        %p527 = scmp.lt.s32.totalorder %s30, 1
        %s528 = scalar_select %p527, %s30, 1
        %s529 = scalar_lea.vmem %s1, %s528
        %v531 = vld [vmem:[%s526] sm:$0xf]
        %v532 = vld [vmem:[%s529] sm:$0x1]
        %v533 = vld [vmem:[%s2] sm:$0xff]
        %v534 = vld [vmem:[%s2 + $0x8] sm:$0xff]
        %v535 = vld [vmem:[%s2 + $0x10] sm:$0xff]
        %v536 = vld [vmem:[%s2 + $0x18] sm:$0xff]
        %v537 = vld [vmem:[%s2 + $0x20] sm:$0xff]
        %v538 = vld [vmem:[%s2 + $0x28] sm:$0xff]
        %v539 = vld [vmem:[%s2 + $0x30] sm:$0xff]
        %v540 = vld [vmem:[%s2 + $0x38] sm:$0xff]
        %v541 = vld [vmem:[%s3] sm:$0x3]
        %v542 = vunpack.c.l.bf16 %v541
        %v544 = vlaneseq
        %v545 = vshrl.u32 %v544, 7
        %v546 = vsub.s32 0, %v545
        %v547 = vrot.slane %v542, %v546
        %v548 = vlaneseq
        %v549 = vshrl.u32 %v548, 7
        %v550 = vsub.s32 2, %v549
        %v551 = vrot.slane %v542, %v550
        %v554 = vlaneseq
        %v555 = vshrl.u32 %v554, 7
        %v556 = vsub.s32 0, %v555
        %v557 = vrot.slane %v547, %v556
        %v558 = vlaneseq
        %v559 = vshrl.u32 %v558, 7
        %v560 = vsub.s32 0, %v559
        %v561 = vrot.slane %v551, %v560
        %v570 = vunpack.c.l.b16 %v533
        %v571 = vunpack.c.h.b16 %v533
        %v572 = vunpack.c.l.b16 %v534
        %v573 = vunpack.c.h.b16 %v534
        %v574 = vunpack.c.l.b16 %v535
        %v575 = vunpack.c.h.b16 %v535
        %v576 = vunpack.c.l.b16 %v536
        %v577 = vunpack.c.h.b16 %v536
        %v578 = vunpack.c.l.b16 %v537
        %v579 = vunpack.c.h.b16 %v537
        %v580 = vunpack.c.l.b16 %v538
        %v581 = vunpack.c.h.b16 %v538
        %v582 = vunpack.c.l.b16 %v539
        %v583 = vunpack.c.h.b16 %v539
        %v584 = vunpack.c.l.b16 %v540
        %v585 = vunpack.c.h.b16 %v540
        %v586 = vpack.c.b16 %v572, %v570
        %v587 = vpack.c.b16 %v573, %v571
        %v588 = vpack.c.b16 %v576, %v574
        %v589 = vpack.c.b16 %v577, %v575
        %v590 = vpack.c.b16 %v580, %v578
        %v591 = vpack.c.b16 %v581, %v579
        %v592 = vpack.c.b16 %v584, %v582
        %v593 = vpack.c.b16 %v585, %v583
        %vm602 = vcmask 523264
        %v604 = vsel %vm602, %v531, 0
        %606 = vmatprep.subr.bf16.mxu0 %v587
        %607 = vmatpush1.bf16.msra.mxu0 %v586
        %608 = vmatprep.subr.bf16.mxu0 %v589
        %609 = vmatpush1.bf16.msra.mxu0 %v588
        %610 = vmatprep.subr.bf16.mxu0 %v591
        %611 = vmatpush1.bf16.msra.mxu0 %v590
        %612 = vmatprep.subr.bf16.mxu0 %v593
        %613 = vmatpush1.bf16.msra.mxu0 %v592
        %614 = vmatprep.subr.bf16.mxu0 0
        %615 = vmatpush1.bf16.msra.mxu0 0
        %616 = vmatprep.subr.bf16.mxu0 0
        %617 = vmatpush1.bf16.msra.mxu0 0
        %618 = vmatprep.subr.bf16.mxu0 0
        %619 = vmatpush1.bf16.msra.mxu0 0
        %620 = vmatprep.subr.bf16.mxu0 0
        %621 = vmatpush1.bf16.msra.mxu0 0
        %622 = vmatprep.subr.bf16.mxu0 0
        %623 = vmatpush1.bf16.msra.mxu0 0
        %624 = vmatprep.subr.bf16.mxu0 0
        %625 = vmatpush1.bf16.msra.mxu0 0
        %626 = vmatprep.subr.bf16.mxu0 0
        %627 = vmatpush1.bf16.msra.mxu0 0
        %628 = vmatprep.subr.bf16.mxu0 0
        %629 = vmatpush1.bf16.msra.mxu0 0
        %630 = vmatprep.subr.bf16.mxu0 0
        %631 = vmatpush1.bf16.msra.mxu0 0
        %632 = vmatprep.subr.bf16.mxu0 0
        %633 = vmatpush1.bf16.msra.mxu0 0
        %634 = vmatprep.subr.bf16.mxu0 0
        %635 = vmatpush1.bf16.msra.mxu0 0
        %636 = vmatprep.subr.bf16.mxu0 0
        %637 = vmatpush1.bf16.msra.mxu0 0
        %638 = vmatprep.mubr.bf16.mxu0 0
        %639 = vmatmul.mubr.bf16.gmra.mrb[0].mxu0 %v604
        %v640 = vpop.f32.mrb[0].mxu0
        %v641 = vadd.f32 %v557, %v640
        %v642 = vpop.f32.mrb[0].mxu0
        %v643 = vadd.f32 %v561, %v642
        %v644 = vpop.f32.mrb[0].mxu0
        %v645 = vpop.f32.mrb[0].mxu0
        %646 = vdwg.mxu0
        %v647 = vmul.f32 %v641, 0.35355338
        %v649 = vlaneseq
        %v650 = vshrl.u32 %v649, 7
        %v651 = vsub.s32 0, %v650
        %v652 = vrot.slane %v532, %v651
        %655 = vrot.lane.b32.xlu0 %v641, 64
        %v656 = vpop.permute.xlu0 %655
        %vm657 = vcmask 64512
        %v659 = vsel %vm657, %v647, 0
        %v661 = vsel %vm657, %v656, 0
        %663 = vmatprep.subr.mxu0 0.0
        %664 = vmatpush1.xpose.msra.mxu0 %v661
        %665 = vmatprep.subr.mxu0 0.0
        %666 = vmatpush1.xpose.msra.mxu0 0.0
        %667 = vmatprep.subr.mxu0 0.0
        %668 = vmatpush1.xpose.msra.mxu0 0.0
        %669 = vmatprep.subr.mxu0 0.0
        %670 = vmatpush1.xpose.msra.mxu0 0.0
        %671 = vmatprep.subr.mxu0 0.0
        %672 = vmatpush1.xpose.msra.mxu0 0.0
        %673 = vmatprep.subr.mxu0 0.0
        %674 = vmatpush1.xpose.msra.mxu0 0.0
        %675 = vmatprep.subr.mxu0 0.0
        %676 = vmatpush1.xpose.msra.mxu0 0.0
        %677 = vmatprep.subr.mxu0 0.0
        %678 = vmatpush1.xpose.msra.mxu0 0.0
        %679 = vmatprep.subr.mxu0 0.0
        %680 = vmatpush1.xpose.msra.mxu0 0.0
        %681 = vmatprep.subr.mxu0 0.0
        %682 = vmatpush1.xpose.msra.mxu0 0.0
        %683 = vmatprep.subr.mxu0 0.0
        %684 = vmatpush1.xpose.msra.mxu0 0.0
        %685 = vmatprep.subr.mxu0 0.0
        %686 = vmatpush1.xpose.msra.mxu0 0.0
        %687 = vmatprep.subr.mxu0 0.0
        %688 = vmatpush1.xpose.msra.mxu0 0.0
        %689 = vmatprep.subr.mxu0 0.0
        %690 = vmatpush1.xpose.msra.mxu0 0.0
        %691 = vmatprep.subr.mxu0 0.0
        %692 = vmatpush1.xpose.msra.mxu0 0.0
        %693 = vmatprep.subr.mxu0 0.0
        %694 = vmatpush1.xpose.msra.mxu0 0.0
        %695 = vmatprep.subr.mxu0 0.0
        %696 = vmatpush1.xpose.msra.mxu0 0.0
        %697 = vmatprep.subr.mxu0 0.0
        %698 = vmatpush1.xpose.msra.mxu0 0.0
        %699 = vmatprep.subr.mxu0 0.0
        %700 = vmatpush1.xpose.msra.mxu0 0.0
        %701 = vmatprep.subr.mxu0 0.0
        %702 = vmatpush1.xpose.msra.mxu0 0.0
        %703 = vmatprep.subr.mxu0 0.0
        %704 = vmatpush1.xpose.msra.mxu0 0.0
        %705 = vmatprep.subr.mxu0 0.0
        %706 = vmatpush1.xpose.msra.mxu0 0.0
        %707 = vmatprep.subr.mxu0 0.0
        %708 = vmatpush1.xpose.msra.mxu0 0.0
        %709 = vmatprep.subr.mxu0 0.0
        %710 = vmatpush1.xpose.msra.mxu0 0.0
        %711 = vmatprep.subr.mxu0 0.0
        %712 = vmatpush1.xpose.msra.mxu0 0.0
        %713 = vmatprep.subr.mxu0 0.0
        %714 = vmatpush1.xpose.msra.mxu0 0.0
        %715 = vmatprep.subr.mxu0 0.0
        %716 = vmatpush1.xpose.msra.mxu0 0.0
        %717 = vmatprep.subr.mxu0 0.0
        %718 = vmatpush1.xpose.msra.mxu0 0.0
        %719 = vmatprep.subr.mxu0 0.0
        %720 = vmatpush1.xpose.msra.mxu0 0.0
        %721 = vmatprep.subr.mxu0 0.0
        %722 = vmatpush1.xpose.msra.mxu0 0.0
        %723 = vmatprep.subr.mxu0 0.0
        %724 = vmatpush1.xpose.msra.mxu0 0.0
        %725 = vmatprep.subr.mxu0 0.0
        %726 = vmatpush1.xpose.msra.mxu0 0.0
        %727 = vmatprep.mubr.f32.mxu0 0.0
        %728 = vmatmul.mubr.f32.gmra.mrb[0].mxu0 %v659
        %v729 = vpop.f32.mrb[0].mxu0
        %v730 = vadd.f32 %v652, %v729
        %v731 = vpop.f32.mrb[0].mxu0
        %732 = vdwg.mxu0
        %v733 = vsel %vm657, %v730, -inf
        %734 = vmax.xlane.f32.xlu0 %v733
        %v735 = vpop.xlane.xlu0 %734
        %v736 = vsub.f32 %v730, %v735
        %v737 = vmul.f32 %v736, 1.442695
        %v738 = vpow.pop %v737
        %v739 = vsel %vm657, %v738, 0.0
        %740 = vadd.xlane.f32.xlu0 %v739
        %v741 = vpop.xlane.xlu0 %740
        %v742 = vrcp.pop %v741
        %v743 = vmul.f32 %v738, %v742
        %v745 = vsel %vm657, %v743, 0
        %747 = vmatprep.subr.mxu0 0.0
        %748 = vmatpush1.msra.mxu0 %v643
        %749 = vmatprep.subr.mxu0 0.0
        %750 = vmatpush1.msra.mxu0 0.0
        %751 = vmatprep.subr.mxu0 0.0
        %752 = vmatpush1.msra.mxu0 0.0
        %753 = vmatprep.subr.mxu0 0.0
        %754 = vmatpush1.msra.mxu0 0.0
        %755 = vmatprep.subr.mxu0 0.0
        %756 = vmatpush1.msra.mxu0 0.0
        %757 = vmatprep.subr.mxu0 0.0
        %758 = vmatpush1.msra.mxu0 0.0
        %759 = vmatprep.subr.mxu0 0.0
        %760 = vmatpush1.msra.mxu0 0.0
        %761 = vmatprep.subr.mxu0 0.0
        %762 = vmatpush1.msra.mxu0 0.0
        %763 = vmatprep.subr.mxu0 0.0
        %764 = vmatpush1.msra.mxu0 0.0
        %765 = vmatprep.subr.mxu0 0.0
        %766 = vmatpush1.msra.mxu0 0.0
        %767 = vmatprep.subr.mxu0 0.0
        %768 = vmatpush1.msra.mxu0 0.0
        %769 = vmatprep.subr.mxu0 0.0
        %770 = vmatpush1.msra.mxu0 0.0
        %771 = vmatprep.subr.mxu0 0.0
        %772 = vmatpush1.msra.mxu0 0.0
        %773 = vmatprep.subr.mxu0 0.0
        %774 = vmatpush1.msra.mxu0 0.0
        %775 = vmatprep.subr.mxu0 0.0
        %776 = vmatpush1.msra.mxu0 0.0
        %777 = vmatprep.subr.mxu0 0.0
        %778 = vmatpush1.msra.mxu0 0.0
        %779 = vmatprep.subr.mxu0 0.0
        %780 = vmatpush1.msra.mxu0 0.0
        %781 = vmatprep.subr.mxu0 0.0
        %782 = vmatpush1.msra.mxu0 0.0
        %783 = vmatprep.subr.mxu0 0.0
        %784 = vmatpush1.msra.mxu0 0.0
        %785 = vmatprep.subr.mxu0 0.0
        %786 = vmatpush1.msra.mxu0 0.0
        %787 = vmatprep.subr.mxu0 0.0
        %788 = vmatpush1.msra.mxu0 0.0
        %789 = vmatprep.subr.mxu0 0.0
        %790 = vmatpush1.msra.mxu0 0.0
        %791 = vmatprep.subr.mxu0 0.0
        %792 = vmatpush1.msra.mxu0 0.0
        %793 = vmatprep.subr.mxu0 0.0
        %794 = vmatpush1.msra.mxu0 0.0
        %795 = vmatprep.subr.mxu0 0.0
        %796 = vmatpush1.msra.mxu0 0.0
        %797 = vmatprep.subr.mxu0 0.0
        %798 = vmatpush1.msra.mxu0 0.0
        %799 = vmatprep.subr.mxu0 0.0
        %800 = vmatpush1.msra.mxu0 0.0
        %801 = vmatprep.subr.mxu0 0.0
        %802 = vmatpush1.msra.mxu0 0.0
        %803 = vmatprep.subr.mxu0 0.0
        %804 = vmatpush1.msra.mxu0 0.0
        %805 = vmatprep.subr.mxu0 0.0
        %806 = vmatpush1.msra.mxu0 0.0
        %807 = vmatprep.subr.mxu0 0.0
        %808 = vmatpush1.msra.mxu0 0.0
        %809 = vmatprep.subr.mxu0 0.0
        %810 = vmatpush1.msra.mxu0 0.0
        %811 = vmatprep.mubr.f32.mxu0 0.0
        %812 = vmatmul.mubr.f32.gmra.mrb[0].mxu0 %v745
        %v813 = vpop.f32.mrb[0].mxu0
        %v814 = vadd.f32 0.0, %v813
        %v815 = vpop.f32.mrb[0].mxu0
        %816 = vdwg.mxu0
        %817 = vrot.lane.b32.xlu0 %v647, 120
        %v818 = vpop.permute.xlu0 %817
        %819 = vrot.lane.b32.xlu0 %v641, 56
        %v820 = vpop.permute.xlu0 %819
        %v821 = vsel %vm657, %v818, 0
        %v823 = vsel %vm657, %v820, 0
        %825 = vmatprep.subr.mxu0 0.0
        %826 = vmatpush1.xpose.msra.mxu0 %v823
        %827 = vmatprep.subr.mxu0 0.0
        %828 = vmatpush1.xpose.msra.mxu0 0.0
        %829 = vmatprep.subr.mxu0 0.0
        %830 = vmatpush1.xpose.msra.mxu0 0.0
        %831 = vmatprep.subr.mxu0 0.0
        %832 = vmatpush1.xpose.msra.mxu0 0.0
        %833 = vmatprep.subr.mxu0 0.0
        %834 = vmatpush1.xpose.msra.mxu0 0.0
        %835 = vmatprep.subr.mxu0 0.0
        %836 = vmatpush1.xpose.msra.mxu0 0.0
        %837 = vmatprep.subr.mxu0 0.0
        %838 = vmatpush1.xpose.msra.mxu0 0.0
        %839 = vmatprep.subr.mxu0 0.0
        %840 = vmatpush1.xpose.msra.mxu0 0.0
        %841 = vmatprep.subr.mxu0 0.0
        %842 = vmatpush1.xpose.msra.mxu0 0.0
        %843 = vmatprep.subr.mxu0 0.0
        %844 = vmatpush1.xpose.msra.mxu0 0.0
        %845 = vmatprep.subr.mxu0 0.0
        %846 = vmatpush1.xpose.msra.mxu0 0.0
        %847 = vmatprep.subr.mxu0 0.0
        %848 = vmatpush1.xpose.msra.mxu0 0.0
        %849 = vmatprep.subr.mxu0 0.0
        %850 = vmatpush1.xpose.msra.mxu0 0.0
        %851 = vmatprep.subr.mxu0 0.0
        %852 = vmatpush1.xpose.msra.mxu0 0.0
        %853 = vmatprep.subr.mxu0 0.0
        %854 = vmatpush1.xpose.msra.mxu0 0.0
        %855 = vmatprep.subr.mxu0 0.0
        %856 = vmatpush1.xpose.msra.mxu0 0.0
        %857 = vmatprep.subr.mxu0 0.0
        %858 = vmatpush1.xpose.msra.mxu0 0.0
        %859 = vmatprep.subr.mxu0 0.0
        %860 = vmatpush1.xpose.msra.mxu0 0.0
        %861 = vmatprep.subr.mxu0 0.0
        %862 = vmatpush1.xpose.msra.mxu0 0.0
        %863 = vmatprep.subr.mxu0 0.0
        %864 = vmatpush1.xpose.msra.mxu0 0.0
        %865 = vmatprep.subr.mxu0 0.0
        %866 = vmatpush1.xpose.msra.mxu0 0.0
        %867 = vmatprep.subr.mxu0 0.0
        %868 = vmatpush1.xpose.msra.mxu0 0.0
        %869 = vmatprep.subr.mxu0 0.0
        %870 = vmatpush1.xpose.msra.mxu0 0.0
        %871 = vmatprep.subr.mxu0 0.0
        %872 = vmatpush1.xpose.msra.mxu0 0.0
        %873 = vmatprep.subr.mxu0 0.0
        %874 = vmatpush1.xpose.msra.mxu0 0.0
        %875 = vmatprep.subr.mxu0 0.0
        %876 = vmatpush1.xpose.msra.mxu0 0.0
        %877 = vmatprep.subr.mxu0 0.0
        %878 = vmatpush1.xpose.msra.mxu0 0.0
        %879 = vmatprep.subr.mxu0 0.0
        %880 = vmatpush1.xpose.msra.mxu0 0.0
        %881 = vmatprep.subr.mxu0 0.0
        %882 = vmatpush1.xpose.msra.mxu0 0.0
        %883 = vmatprep.subr.mxu0 0.0
        %884 = vmatpush1.xpose.msra.mxu0 0.0
        %885 = vmatprep.subr.mxu0 0.0
        %886 = vmatpush1.xpose.msra.mxu0 0.0
        %887 = vmatprep.subr.mxu0 0.0
        %888 = vmatpush1.xpose.msra.mxu0 0.0
        %889 = vmatprep.mubr.f32.mxu0 0.0
        %890 = vmatmul.mubr.f32.gmra.mrb[0].mxu0 %v821
        %v891 = vpop.f32.mrb[0].mxu0
        %v892 = vadd.f32 %v652, %v891
        %v893 = vpop.f32.mrb[0].mxu0
        %894 = vdwg.mxu0
        %v895 = vsel %vm657, %v892, -inf
        %896 = vmax.xlane.f32.xlu0 %v895
        %v897 = vpop.xlane.xlu0 %896
        %v898 = vsub.f32 %v892, %v897
        %v899 = vmul.f32 %v898, 1.442695
        %v900 = vpow.pop %v899
        %v901 = vsel %vm657, %v900, 0.0
        %902 = vadd.xlane.f32.xlu0 %v901
        %v903 = vpop.xlane.xlu0 %902
        %v904 = vrcp.pop %v903
        %v905 = vmul.f32 %v900, %v904
        %907 = vrot.lane.b32.xlu0 %v643, 120
        %v908 = vpop.permute.xlu0 %907
        %v911 = vsel %vm657, %v905, 0
        %913 = vmatprep.subr.mxu0 0.0
        %914 = vmatpush1.msra.mxu0 %v908
        %915 = vmatprep.subr.mxu0 0.0
        %916 = vmatpush1.msra.mxu0 0.0
        %917 = vmatprep.subr.mxu0 0.0
        %918 = vmatpush1.msra.mxu0 0.0
        %919 = vmatprep.subr.mxu0 0.0
        %920 = vmatpush1.msra.mxu0 0.0
        %921 = vmatprep.subr.mxu0 0.0
        %922 = vmatpush1.msra.mxu0 0.0
        %923 = vmatprep.subr.mxu0 0.0
        %924 = vmatpush1.msra.mxu0 0.0
        %925 = vmatprep.subr.mxu0 0.0
        %926 = vmatpush1.msra.mxu0 0.0
        %927 = vmatprep.subr.mxu0 0.0
        %928 = vmatpush1.msra.mxu0 0.0
        %929 = vmatprep.subr.mxu0 0.0
        %930 = vmatpush1.msra.mxu0 0.0
        %931 = vmatprep.subr.mxu0 0.0
        %932 = vmatpush1.msra.mxu0 0.0
        %933 = vmatprep.subr.mxu0 0.0
        %934 = vmatpush1.msra.mxu0 0.0
        %935 = vmatprep.subr.mxu0 0.0
        %936 = vmatpush1.msra.mxu0 0.0
        %937 = vmatprep.subr.mxu0 0.0
        %938 = vmatpush1.msra.mxu0 0.0
        %939 = vmatprep.subr.mxu0 0.0
        %940 = vmatpush1.msra.mxu0 0.0
        %941 = vmatprep.subr.mxu0 0.0
        %942 = vmatpush1.msra.mxu0 0.0
        %943 = vmatprep.subr.mxu0 0.0
        %944 = vmatpush1.msra.mxu0 0.0
        %945 = vmatprep.subr.mxu0 0.0
        %946 = vmatpush1.msra.mxu0 0.0
        %947 = vmatprep.subr.mxu0 0.0
        %948 = vmatpush1.msra.mxu0 0.0
        %949 = vmatprep.subr.mxu0 0.0
        %950 = vmatpush1.msra.mxu0 0.0
        %951 = vmatprep.subr.mxu0 0.0
        %952 = vmatpush1.msra.mxu0 0.0
        %953 = vmatprep.subr.mxu0 0.0
        %954 = vmatpush1.msra.mxu0 0.0
        %955 = vmatprep.subr.mxu0 0.0
        %956 = vmatpush1.msra.mxu0 0.0
        %957 = vmatprep.subr.mxu0 0.0
        %958 = vmatpush1.msra.mxu0 0.0
        %959 = vmatprep.subr.mxu0 0.0
        %960 = vmatpush1.msra.mxu0 0.0
        %961 = vmatprep.subr.mxu0 0.0
        %962 = vmatpush1.msra.mxu0 0.0
        %963 = vmatprep.subr.mxu0 0.0
        %964 = vmatpush1.msra.mxu0 0.0
        %965 = vmatprep.subr.mxu0 0.0
        %966 = vmatpush1.msra.mxu0 0.0
        %967 = vmatprep.subr.mxu0 0.0
        %968 = vmatpush1.msra.mxu0 0.0
        %969 = vmatprep.subr.mxu0 0.0
        %970 = vmatpush1.msra.mxu0 0.0
        %971 = vmatprep.subr.mxu0 0.0
        %972 = vmatpush1.msra.mxu0 0.0
        %973 = vmatprep.subr.mxu0 0.0
        %974 = vmatpush1.msra.mxu0 0.0
        %975 = vmatprep.subr.mxu0 0.0
        %976 = vmatpush1.msra.mxu0 0.0
        %977 = vmatprep.mubr.f32.mxu0 0.0
        %978 = vmatmul.mubr.f32.gmra.mrb[0].mxu0 %v911
        %v979 = vpop.f32.mrb[0].mxu0
        %v980 = vadd.f32 0.0, %v979
        %v981 = vpop.f32.mrb[0].mxu0
        %982 = vdwg.mxu0
        %983 = vrot.lane.b32.xlu0 %v647, 112
        %v984 = vpop.permute.xlu0 %983
        %985 = vrot.lane.b32.xlu0 %v641, 48
        %v986 = vpop.permute.xlu0 %985
        %v987 = vsel %vm657, %v984, 0
        %v989 = vsel %vm657, %v986, 0
        %991 = vmatprep.subr.mxu0 0.0
        %992 = vmatpush1.xpose.msra.mxu0 %v989
        %993 = vmatprep.subr.mxu0 0.0
        %994 = vmatpush1.xpose.msra.mxu0 0.0
        %995 = vmatprep.subr.mxu0 0.0
        %996 = vmatpush1.xpose.msra.mxu0 0.0
        %997 = vmatprep.subr.mxu0 0.0
        %998 = vmatpush1.xpose.msra.mxu0 0.0
        %999 = vmatprep.subr.mxu0 0.0
        %1000 = vmatpush1.xpose.msra.mxu0 0.0
        %1001 = vmatprep.subr.mxu0 0.0
        %1002 = vmatpush1.xpose.msra.mxu0 0.0
        %1003 = vmatprep.subr.mxu0 0.0
        %1004 = vmatpush1.xpose.msra.mxu0 0.0
        %1005 = vmatprep.subr.mxu0 0.0
        %1006 = vmatpush1.xpose.msra.mxu0 0.0
        %1007 = vmatprep.subr.mxu0 0.0
        %1008 = vmatpush1.xpose.msra.mxu0 0.0
        %1009 = vmatprep.subr.mxu0 0.0
        %1010 = vmatpush1.xpose.msra.mxu0 0.0
        %1011 = vmatprep.subr.mxu0 0.0
        %1012 = vmatpush1.xpose.msra.mxu0 0.0
        %1013 = vmatprep.subr.mxu0 0.0
        %1014 = vmatpush1.xpose.msra.mxu0 0.0
        %1015 = vmatprep.subr.mxu0 0.0
        %1016 = vmatpush1.xpose.msra.mxu0 0.0
        %1017 = vmatprep.subr.mxu0 0.0
        %1018 = vmatpush1.xpose.msra.mxu0 0.0
        %1019 = vmatprep.subr.mxu0 0.0
        %1020 = vmatpush1.xpose.msra.mxu0 0.0
        %1021 = vmatprep.subr.mxu0 0.0
        %1022 = vmatpush1.xpose.msra.mxu0 0.0
        %1023 = vmatprep.subr.mxu0 0.0
        %1024 = vmatpush1.xpose.msra.mxu0 0.0
        %1025 = vmatprep.subr.mxu0 0.0
        %1026 = vmatpush1.xpose.msra.mxu0 0.0
        %1027 = vmatprep.subr.mxu0 0.0
        %1028 = vmatpush1.xpose.msra.mxu0 0.0
        %1029 = vmatprep.subr.mxu0 0.0
        %1030 = vmatpush1.xpose.msra.mxu0 0.0
        %1031 = vmatprep.subr.mxu0 0.0
        %1032 = vmatpush1.xpose.msra.mxu0 0.0
        %1033 = vmatprep.subr.mxu0 0.0
        %1034 = vmatpush1.xpose.msra.mxu0 0.0
        %1035 = vmatprep.subr.mxu0 0.0
        %1036 = vmatpush1.xpose.msra.mxu0 0.0
        %1037 = vmatprep.subr.mxu0 0.0
        %1038 = vmatpush1.xpose.msra.mxu0 0.0
        %1039 = vmatprep.subr.mxu0 0.0
        %1040 = vmatpush1.xpose.msra.mxu0 0.0
        %1041 = vmatprep.subr.mxu0 0.0
        %1042 = vmatpush1.xpose.msra.mxu0 0.0
        %1043 = vmatprep.subr.mxu0 0.0
        %1044 = vmatpush1.xpose.msra.mxu0 0.0
        %1045 = vmatprep.subr.mxu0 0.0
        %1046 = vmatpush1.xpose.msra.mxu0 0.0
        %1047 = vmatprep.subr.mxu0 0.0
        %1048 = vmatpush1.xpose.msra.mxu0 0.0
        %1049 = vmatprep.subr.mxu0 0.0
        %1050 = vmatpush1.xpose.msra.mxu0 0.0
        %1051 = vmatprep.subr.mxu0 0.0
        %1052 = vmatpush1.xpose.msra.mxu0 0.0
        %1053 = vmatprep.subr.mxu0 0.0
        %1054 = vmatpush1.xpose.msra.mxu0 0.0
        %1055 = vmatprep.mubr.f32.mxu0 0.0
        %1056 = vmatmul.mubr.f32.gmra.mrb[0].mxu0 %v987
        %v1057 = vpop.f32.mrb[0].mxu0
        %v1058 = vadd.f32 %v652, %v1057
        %v1059 = vpop.f32.mrb[0].mxu0
        %1060 = vdwg.mxu0
        %v1061 = vsel %vm657, %v1058, -inf
        %1062 = vmax.xlane.f32.xlu0 %v1061
        %v1063 = vpop.xlane.xlu0 %1062
        %v1064 = vsub.f32 %v1058, %v1063
        %v1065 = vmul.f32 %v1064, 1.442695
        %v1066 = vpow.pop %v1065
        %v1067 = vsel %vm657, %v1066, 0.0
        %1068 = vadd.xlane.f32.xlu0 %v1067
        %v1069 = vpop.xlane.xlu0 %1068
        %v1070 = vrcp.pop %v1069
        %v1071 = vmul.f32 %v1066, %v1070
        %1072 = vrot.lane.b32.xlu0 %v643, 112
        %v1073 = vpop.permute.xlu0 %1072
        %v1076 = vsel %vm657, %v1071, 0
        %1078 = vmatprep.subr.mxu0 0.0
        %1079 = vmatpush1.msra.mxu0 %v1073
        %1080 = vmatprep.subr.mxu0 0.0
        %1081 = vmatpush1.msra.mxu0 0.0
        %1082 = vmatprep.subr.mxu0 0.0
        %1083 = vmatpush1.msra.mxu0 0.0
        %1084 = vmatprep.subr.mxu0 0.0
        %1085 = vmatpush1.msra.mxu0 0.0
        %1086 = vmatprep.subr.mxu0 0.0
        %1087 = vmatpush1.msra.mxu0 0.0
        %1088 = vmatprep.subr.mxu0 0.0
        %1089 = vmatpush1.msra.mxu0 0.0
        %1090 = vmatprep.subr.mxu0 0.0
        %1091 = vmatpush1.msra.mxu0 0.0
        %1092 = vmatprep.subr.mxu0 0.0
        %1093 = vmatpush1.msra.mxu0 0.0
        %1094 = vmatprep.subr.mxu0 0.0
        %1095 = vmatpush1.msra.mxu0 0.0
        %1096 = vmatprep.subr.mxu0 0.0
        %1097 = vmatpush1.msra.mxu0 0.0
        %1098 = vmatprep.subr.mxu0 0.0
        %1099 = vmatpush1.msra.mxu0 0.0
        %1100 = vmatprep.subr.mxu0 0.0
        %1101 = vmatpush1.msra.mxu0 0.0
        %1102 = vmatprep.subr.mxu0 0.0
        %1103 = vmatpush1.msra.mxu0 0.0
        %1104 = vmatprep.subr.mxu0 0.0
        %1105 = vmatpush1.msra.mxu0 0.0
        %1106 = vmatprep.subr.mxu0 0.0
        %1107 = vmatpush1.msra.mxu0 0.0
        %1108 = vmatprep.subr.mxu0 0.0
        %1109 = vmatpush1.msra.mxu0 0.0
        %1110 = vmatprep.subr.mxu0 0.0
        %1111 = vmatpush1.msra.mxu0 0.0
        %1112 = vmatprep.subr.mxu0 0.0
        %1113 = vmatpush1.msra.mxu0 0.0
        %1114 = vmatprep.subr.mxu0 0.0
        %1115 = vmatpush1.msra.mxu0 0.0
        %1116 = vmatprep.subr.mxu0 0.0
        %1117 = vmatpush1.msra.mxu0 0.0
        %1118 = vmatprep.subr.mxu0 0.0
        %1119 = vmatpush1.msra.mxu0 0.0
        %1120 = vmatprep.subr.mxu0 0.0
        %1121 = vmatpush1.msra.mxu0 0.0
        %1122 = vmatprep.subr.mxu0 0.0
        %1123 = vmatpush1.msra.mxu0 0.0
        %1124 = vmatprep.subr.mxu0 0.0
        %1125 = vmatpush1.msra.mxu0 0.0
        %1126 = vmatprep.subr.mxu0 0.0
        %1127 = vmatpush1.msra.mxu0 0.0
        %1128 = vmatprep.subr.mxu0 0.0
        %1129 = vmatpush1.msra.mxu0 0.0
        %1130 = vmatprep.subr.mxu0 0.0
        %1131 = vmatpush1.msra.mxu0 0.0
        %1132 = vmatprep.subr.mxu0 0.0
        %1133 = vmatpush1.msra.mxu0 0.0
        %1134 = vmatprep.subr.mxu0 0.0
        %1135 = vmatpush1.msra.mxu0 0.0
        %1136 = vmatprep.subr.mxu0 0.0
        %1137 = vmatpush1.msra.mxu0 0.0
        %1138 = vmatprep.subr.mxu0 0.0
        %1139 = vmatpush1.msra.mxu0 0.0
        %1140 = vmatprep.subr.mxu0 0.0
        %1141 = vmatpush1.msra.mxu0 0.0
        %1142 = vmatprep.mubr.f32.mxu0 0.0
        %1143 = vmatmul.mubr.f32.gmra.mrb[0].mxu0 %v1076
        %v1144 = vpop.f32.mrb[0].mxu0
        %v1145 = vadd.f32 0.0, %v1144
        %v1146 = vpop.f32.mrb[0].mxu0
        %1147 = vdwg.mxu0
        %1148 = vrot.lane.b32.xlu0 %v647, 104
        %v1149 = vpop.permute.xlu0 %1148
        %1150 = vrot.lane.b32.xlu0 %v641, 40
        %v1151 = vpop.permute.xlu0 %1150
        %v1152 = vsel %vm657, %v1149, 0
        %v1154 = vsel %vm657, %v1151, 0
        %1156 = vmatprep.subr.mxu0 0.0
        %1157 = vmatpush1.xpose.msra.mxu0 %v1154
        %1158 = vmatprep.subr.mxu0 0.0
        %1159 = vmatpush1.xpose.msra.mxu0 0.0
        %1160 = vmatprep.subr.mxu0 0.0
        %1161 = vmatpush1.xpose.msra.mxu0 0.0
        %1162 = vmatprep.subr.mxu0 0.0
        %1163 = vmatpush1.xpose.msra.mxu0 0.0
        %1164 = vmatprep.subr.mxu0 0.0
        %1165 = vmatpush1.xpose.msra.mxu0 0.0
        %1166 = vmatprep.subr.mxu0 0.0
        %1167 = vmatpush1.xpose.msra.mxu0 0.0
        %1168 = vmatprep.subr.mxu0 0.0
        %1169 = vmatpush1.xpose.msra.mxu0 0.0
        %1170 = vmatprep.subr.mxu0 0.0
        %1171 = vmatpush1.xpose.msra.mxu0 0.0
        %1172 = vmatprep.subr.mxu0 0.0
        %1173 = vmatpush1.xpose.msra.mxu0 0.0
        %1174 = vmatprep.subr.mxu0 0.0
        %1175 = vmatpush1.xpose.msra.mxu0 0.0
        %1176 = vmatprep.subr.mxu0 0.0
        %1177 = vmatpush1.xpose.msra.mxu0 0.0
        %1178 = vmatprep.subr.mxu0 0.0
        %1179 = vmatpush1.xpose.msra.mxu0 0.0
        %1180 = vmatprep.subr.mxu0 0.0
        %1181 = vmatpush1.xpose.msra.mxu0 0.0
        %1182 = vmatprep.subr.mxu0 0.0
        %1183 = vmatpush1.xpose.msra.mxu0 0.0
        %1184 = vmatprep.subr.mxu0 0.0
        %1185 = vmatpush1.xpose.msra.mxu0 0.0
        %1186 = vmatprep.subr.mxu0 0.0
        %1187 = vmatpush1.xpose.msra.mxu0 0.0
        %1188 = vmatprep.subr.mxu0 0.0
        %1189 = vmatpush1.xpose.msra.mxu0 0.0
        %1190 = vmatprep.subr.mxu0 0.0
        %1191 = vmatpush1.xpose.msra.mxu0 0.0
        %1192 = vmatprep.subr.mxu0 0.0
        %1193 = vmatpush1.xpose.msra.mxu0 0.0
        %1194 = vmatprep.subr.mxu0 0.0
        %1195 = vmatpush1.xpose.msra.mxu0 0.0
        %1196 = vmatprep.subr.mxu0 0.0
        %1197 = vmatpush1.xpose.msra.mxu0 0.0
        %1198 = vmatprep.subr.mxu0 0.0
        %1199 = vmatpush1.xpose.msra.mxu0 0.0
        %1200 = vmatprep.subr.mxu0 0.0
        %1201 = vmatpush1.xpose.msra.mxu0 0.0
        %1202 = vmatprep.subr.mxu0 0.0
        %1203 = vmatpush1.xpose.msra.mxu0 0.0
        %1204 = vmatprep.subr.mxu0 0.0
        %1205 = vmatpush1.xpose.msra.mxu0 0.0
        %1206 = vmatprep.subr.mxu0 0.0
        %1207 = vmatpush1.xpose.msra.mxu0 0.0
        %1208 = vmatprep.subr.mxu0 0.0
        %1209 = vmatpush1.xpose.msra.mxu0 0.0
        %1210 = vmatprep.subr.mxu0 0.0
        %1211 = vmatpush1.xpose.msra.mxu0 0.0
        %1212 = vmatprep.subr.mxu0 0.0
        %1213 = vmatpush1.xpose.msra.mxu0 0.0
        %1214 = vmatprep.subr.mxu0 0.0
        %1215 = vmatpush1.xpose.msra.mxu0 0.0
        %1216 = vmatprep.subr.mxu0 0.0
        %1217 = vmatpush1.xpose.msra.mxu0 0.0
        %1218 = vmatprep.subr.mxu0 0.0
        %1219 = vmatpush1.xpose.msra.mxu0 0.0
        %1220 = vmatprep.mubr.f32.mxu0 0.0
        %1221 = vmatmul.mubr.f32.gmra.mrb[0].mxu0 %v1152
        %v1222 = vpop.f32.mrb[0].mxu0
        %v1223 = vadd.f32 %v652, %v1222
        %v1224 = vpop.f32.mrb[0].mxu0
        %1225 = vdwg.mxu0
        %v1226 = vsel %vm657, %v1223, -inf
        %1227 = vmax.xlane.f32.xlu0 %v1226
        %v1228 = vpop.xlane.xlu0 %1227
        %v1229 = vsub.f32 %v1223, %v1228
        %v1230 = vmul.f32 %v1229, 1.442695
        %v1231 = vpow.pop %v1230
        %v1232 = vsel %vm657, %v1231, 0.0
        %1233 = vadd.xlane.f32.xlu0 %v1232
        %v1234 = vpop.xlane.xlu0 %1233
        %v1235 = vrcp.pop %v1234
        %v1236 = vmul.f32 %v1231, %v1235
        %1237 = vrot.lane.b32.xlu0 %v643, 104
        %v1238 = vpop.permute.xlu0 %1237
        %v1241 = vsel %vm657, %v1236, 0
        %1243 = vmatprep.subr.mxu0 0.0
        %1244 = vmatpush1.msra.mxu0 %v1238
        %1245 = vmatprep.subr.mxu0 0.0
        %1246 = vmatpush1.msra.mxu0 0.0
        %1247 = vmatprep.subr.mxu0 0.0
        %1248 = vmatpush1.msra.mxu0 0.0
        %1249 = vmatprep.subr.mxu0 0.0
        %1250 = vmatpush1.msra.mxu0 0.0
        %1251 = vmatprep.subr.mxu0 0.0
        %1252 = vmatpush1.msra.mxu0 0.0
        %1253 = vmatprep.subr.mxu0 0.0
        %1254 = vmatpush1.msra.mxu0 0.0
        %1255 = vmatprep.subr.mxu0 0.0
        %1256 = vmatpush1.msra.mxu0 0.0
        %1257 = vmatprep.subr.mxu0 0.0
        %1258 = vmatpush1.msra.mxu0 0.0
        %1259 = vmatprep.subr.mxu0 0.0
        %1260 = vmatpush1.msra.mxu0 0.0
        %1261 = vmatprep.subr.mxu0 0.0
        %1262 = vmatpush1.msra.mxu0 0.0
        %1263 = vmatprep.subr.mxu0 0.0
        %1264 = vmatpush1.msra.mxu0 0.0
        %1265 = vmatprep.subr.mxu0 0.0
        %1266 = vmatpush1.msra.mxu0 0.0
        %1267 = vmatprep.subr.mxu0 0.0
        %1268 = vmatpush1.msra.mxu0 0.0
        %1269 = vmatprep.subr.mxu0 0.0
        %1270 = vmatpush1.msra.mxu0 0.0
        %1271 = vmatprep.subr.mxu0 0.0
        %1272 = vmatpush1.msra.mxu0 0.0
        %1273 = vmatprep.subr.mxu0 0.0
        %1274 = vmatpush1.msra.mxu0 0.0
        %1275 = vmatprep.subr.mxu0 0.0
        %1276 = vmatpush1.msra.mxu0 0.0
        %1277 = vmatprep.subr.mxu0 0.0
        %1278 = vmatpush1.msra.mxu0 0.0
        %1279 = vmatprep.subr.mxu0 0.0
        %1280 = vmatpush1.msra.mxu0 0.0
        %1281 = vmatprep.subr.mxu0 0.0
        %1282 = vmatpush1.msra.mxu0 0.0
        %1283 = vmatprep.subr.mxu0 0.0
        %1284 = vmatpush1.msra.mxu0 0.0
        %1285 = vmatprep.subr.mxu0 0.0
        %1286 = vmatpush1.msra.mxu0 0.0
        %1287 = vmatprep.subr.mxu0 0.0
        %1288 = vmatpush1.msra.mxu0 0.0
        %1289 = vmatprep.subr.mxu0 0.0
        %1290 = vmatpush1.msra.mxu0 0.0
        %1291 = vmatprep.subr.mxu0 0.0
        %1292 = vmatpush1.msra.mxu0 0.0
        %1293 = vmatprep.subr.mxu0 0.0
        %1294 = vmatpush1.msra.mxu0 0.0
        %1295 = vmatprep.subr.mxu0 0.0
        %1296 = vmatpush1.msra.mxu0 0.0
        %1297 = vmatprep.subr.mxu0 0.0
        %1298 = vmatpush1.msra.mxu0 0.0
        %1299 = vmatprep.subr.mxu0 0.0
        %1300 = vmatpush1.msra.mxu0 0.0
        %1301 = vmatprep.subr.mxu0 0.0
        %1302 = vmatpush1.msra.mxu0 0.0
        %1303 = vmatprep.subr.mxu0 0.0
        %1304 = vmatpush1.msra.mxu0 0.0
        %1305 = vmatprep.subr.mxu0 0.0
        %1306 = vmatpush1.msra.mxu0 0.0
        %1307 = vmatprep.mubr.f32.mxu0 0.0
        %1308 = vmatmul.mubr.f32.gmra.mrb[0].mxu0 %v1241
        %v1309 = vpop.f32.mrb[0].mxu0
        %v1310 = vadd.f32 0.0, %v1309
        %v1311 = vpop.f32.mrb[0].mxu0
        %1312 = vdwg.mxu0
        %1313 = vrot.lane.b32.xlu0 %v647, 96
        %v1314 = vpop.permute.xlu0 %1313
        %1315 = vrot.lane.b32.xlu0 %v641, 32
        %v1316 = vpop.permute.xlu0 %1315
        %v1317 = vsel %vm657, %v1314, 0
        %v1319 = vsel %vm657, %v1316, 0
        %1321 = vmatprep.subr.mxu0 0.0
        %1322 = vmatpush1.xpose.msra.mxu0 %v1319
        %1323 = vmatprep.subr.mxu0 0.0
        %1324 = vmatpush1.xpose.msra.mxu0 0.0
        %1325 = vmatprep.subr.mxu0 0.0
        %1326 = vmatpush1.xpose.msra.mxu0 0.0
        %1327 = vmatprep.subr.mxu0 0.0
        %1328 = vmatpush1.xpose.msra.mxu0 0.0
        %1329 = vmatprep.subr.mxu0 0.0
        %1330 = vmatpush1.xpose.msra.mxu0 0.0
        %1331 = vmatprep.subr.mxu0 0.0
        %1332 = vmatpush1.xpose.msra.mxu0 0.0
        %1333 = vmatprep.subr.mxu0 0.0
        %1334 = vmatpush1.xpose.msra.mxu0 0.0
        %1335 = vmatprep.subr.mxu0 0.0
        %1336 = vmatpush1.xpose.msra.mxu0 0.0
        %1337 = vmatprep.subr.mxu0 0.0
        %1338 = vmatpush1.xpose.msra.mxu0 0.0
        %1339 = vmatprep.subr.mxu0 0.0
        %1340 = vmatpush1.xpose.msra.mxu0 0.0
        %1341 = vmatprep.subr.mxu0 0.0
        %1342 = vmatpush1.xpose.msra.mxu0 0.0
        %1343 = vmatprep.subr.mxu0 0.0
        %1344 = vmatpush1.xpose.msra.mxu0 0.0
        %1345 = vmatprep.subr.mxu0 0.0
        %1346 = vmatpush1.xpose.msra.mxu0 0.0
        %1347 = vmatprep.subr.mxu0 0.0
        %1348 = vmatpush1.xpose.msra.mxu0 0.0
        %1349 = vmatprep.subr.mxu0 0.0
        %1350 = vmatpush1.xpose.msra.mxu0 0.0
        %1351 = vmatprep.subr.mxu0 0.0
        %1352 = vmatpush1.xpose.msra.mxu0 0.0
        %1353 = vmatprep.subr.mxu0 0.0
        %1354 = vmatpush1.xpose.msra.mxu0 0.0
        %1355 = vmatprep.subr.mxu0 0.0
        %1356 = vmatpush1.xpose.msra.mxu0 0.0
        %1357 = vmatprep.subr.mxu0 0.0
        %1358 = vmatpush1.xpose.msra.mxu0 0.0
        %1359 = vmatprep.subr.mxu0 0.0
        %1360 = vmatpush1.xpose.msra.mxu0 0.0
        %1361 = vmatprep.subr.mxu0 0.0
        %1362 = vmatpush1.xpose.msra.mxu0 0.0
        %1363 = vmatprep.subr.mxu0 0.0
        %1364 = vmatpush1.xpose.msra.mxu0 0.0
        %1365 = vmatprep.subr.mxu0 0.0
        %1366 = vmatpush1.xpose.msra.mxu0 0.0
        %1367 = vmatprep.subr.mxu0 0.0
        %1368 = vmatpush1.xpose.msra.mxu0 0.0
        %1369 = vmatprep.subr.mxu0 0.0
        %1370 = vmatpush1.xpose.msra.mxu0 0.0
        %1371 = vmatprep.subr.mxu0 0.0
        %1372 = vmatpush1.xpose.msra.mxu0 0.0
        %1373 = vmatprep.subr.mxu0 0.0
        %1374 = vmatpush1.xpose.msra.mxu0 0.0
        %1375 = vmatprep.subr.mxu0 0.0
        %1376 = vmatpush1.xpose.msra.mxu0 0.0
        %1377 = vmatprep.subr.mxu0 0.0
        %1378 = vmatpush1.xpose.msra.mxu0 0.0
        %1379 = vmatprep.subr.mxu0 0.0
        %1380 = vmatpush1.xpose.msra.mxu0 0.0
        %1381 = vmatprep.subr.mxu0 0.0
        %1382 = vmatpush1.xpose.msra.mxu0 0.0
        %1383 = vmatprep.subr.mxu0 0.0
        %1384 = vmatpush1.xpose.msra.mxu0 0.0
        %1385 = vmatprep.mubr.f32.mxu0 0.0
        %1386 = vmatmul.mubr.f32.gmra.mrb[0].mxu0 %v1317
        %v1387 = vpop.f32.mrb[0].mxu0
        %v1388 = vadd.f32 %v652, %v1387
        %v1389 = vpop.f32.mrb[0].mxu0
        %1390 = vdwg.mxu0
        %v1391 = vsel %vm657, %v1388, -inf
        %1392 = vmax.xlane.f32.xlu0 %v1391
        %v1393 = vpop.xlane.xlu0 %1392
        %v1394 = vsub.f32 %v1388, %v1393
        %v1395 = vmul.f32 %v1394, 1.442695
        %v1396 = vpow.pop %v1395
        %v1397 = vsel %vm657, %v1396, 0.0
        %1398 = vadd.xlane.f32.xlu0 %v1397
        %v1399 = vpop.xlane.xlu0 %1398
        %v1400 = vrcp.pop %v1399
        %v1401 = vmul.f32 %v1396, %v1400
        %1402 = vrot.lane.b32.xlu0 %v643, 96
        %v1403 = vpop.permute.xlu0 %1402
        %v1406 = vsel %vm657, %v1401, 0
        %1408 = vmatprep.subr.mxu0 0.0
        %1409 = vmatpush1.msra.mxu0 %v1403
        %1410 = vmatprep.subr.mxu0 0.0
        %1411 = vmatpush1.msra.mxu0 0.0
        %1412 = vmatprep.subr.mxu0 0.0
        %1413 = vmatpush1.msra.mxu0 0.0
        %1414 = vmatprep.subr.mxu0 0.0
        %1415 = vmatpush1.msra.mxu0 0.0
        %1416 = vmatprep.subr.mxu0 0.0
        %1417 = vmatpush1.msra.mxu0 0.0
        %1418 = vmatprep.subr.mxu0 0.0
        %1419 = vmatpush1.msra.mxu0 0.0
        %1420 = vmatprep.subr.mxu0 0.0
        %1421 = vmatpush1.msra.mxu0 0.0
        %1422 = vmatprep.subr.mxu0 0.0
        %1423 = vmatpush1.msra.mxu0 0.0
        %1424 = vmatprep.subr.mxu0 0.0
        %1425 = vmatpush1.msra.mxu0 0.0
        %1426 = vmatprep.subr.mxu0 0.0
        %1427 = vmatpush1.msra.mxu0 0.0
        %1428 = vmatprep.subr.mxu0 0.0
        %1429 = vmatpush1.msra.mxu0 0.0
        %1430 = vmatprep.subr.mxu0 0.0
        %1431 = vmatpush1.msra.mxu0 0.0
        %1432 = vmatprep.subr.mxu0 0.0
        %1433 = vmatpush1.msra.mxu0 0.0
        %1434 = vmatprep.subr.mxu0 0.0
        %1435 = vmatpush1.msra.mxu0 0.0
        %1436 = vmatprep.subr.mxu0 0.0
        %1437 = vmatpush1.msra.mxu0 0.0
        %1438 = vmatprep.subr.mxu0 0.0
        %1439 = vmatpush1.msra.mxu0 0.0
        %1440 = vmatprep.subr.mxu0 0.0
        %1441 = vmatpush1.msra.mxu0 0.0
        %1442 = vmatprep.subr.mxu0 0.0
        %1443 = vmatpush1.msra.mxu0 0.0
        %1444 = vmatprep.subr.mxu0 0.0
        %1445 = vmatpush1.msra.mxu0 0.0
        %1446 = vmatprep.subr.mxu0 0.0
        %1447 = vmatpush1.msra.mxu0 0.0
        %1448 = vmatprep.subr.mxu0 0.0
        %1449 = vmatpush1.msra.mxu0 0.0
        %1450 = vmatprep.subr.mxu0 0.0
        %1451 = vmatpush1.msra.mxu0 0.0
        %1452 = vmatprep.subr.mxu0 0.0
        %1453 = vmatpush1.msra.mxu0 0.0
        %1454 = vmatprep.subr.mxu0 0.0
        %1455 = vmatpush1.msra.mxu0 0.0
        %1456 = vmatprep.subr.mxu0 0.0
        %1457 = vmatpush1.msra.mxu0 0.0
        %1458 = vmatprep.subr.mxu0 0.0
        %1459 = vmatpush1.msra.mxu0 0.0
        %1460 = vmatprep.subr.mxu0 0.0
        %1461 = vmatpush1.msra.mxu0 0.0
        %1462 = vmatprep.subr.mxu0 0.0
        %1463 = vmatpush1.msra.mxu0 0.0
        %1464 = vmatprep.subr.mxu0 0.0
        %1465 = vmatpush1.msra.mxu0 0.0
        %1466 = vmatprep.subr.mxu0 0.0
        %1467 = vmatpush1.msra.mxu0 0.0
        %1468 = vmatprep.subr.mxu0 0.0
        %1469 = vmatpush1.msra.mxu0 0.0
        %1470 = vmatprep.subr.mxu0 0.0
        %1471 = vmatpush1.msra.mxu0 0.0
        %1472 = vmatprep.mubr.f32.mxu0 0.0
        %1473 = vmatmul.mubr.f32.gmra.mrb[0].mxu0 %v1406
        %v1474 = vpop.f32.mrb[0].mxu0
        %v1475 = vadd.f32 0.0, %v1474
        %v1476 = vpop.f32.mrb[0].mxu0
        %1477 = vdwg.mxu0
        %1478 = vrot.lane.b32.xlu0 %v647, 88
        %v1479 = vpop.permute.xlu0 %1478
        %1480 = vrot.lane.b32.xlu0 %v641, 24
        %v1481 = vpop.permute.xlu0 %1480
        %v1482 = vsel %vm657, %v1479, 0
        %v1484 = vsel %vm657, %v1481, 0
        %1486 = vmatprep.subr.mxu0 0.0
        %1487 = vmatpush1.xpose.msra.mxu0 %v1484
        %1488 = vmatprep.subr.mxu0 0.0
        %1489 = vmatpush1.xpose.msra.mxu0 0.0
        %1490 = vmatprep.subr.mxu0 0.0
        %1491 = vmatpush1.xpose.msra.mxu0 0.0
        %1492 = vmatprep.subr.mxu0 0.0
        %1493 = vmatpush1.xpose.msra.mxu0 0.0
        %1494 = vmatprep.subr.mxu0 0.0
        %1495 = vmatpush1.xpose.msra.mxu0 0.0
        %1496 = vmatprep.subr.mxu0 0.0
        %1497 = vmatpush1.xpose.msra.mxu0 0.0
        %1498 = vmatprep.subr.mxu0 0.0
        %1499 = vmatpush1.xpose.msra.mxu0 0.0
        %1500 = vmatprep.subr.mxu0 0.0
        %1501 = vmatpush1.xpose.msra.mxu0 0.0
        %1502 = vmatprep.subr.mxu0 0.0
        %1503 = vmatpush1.xpose.msra.mxu0 0.0
        %1504 = vmatprep.subr.mxu0 0.0
        %1505 = vmatpush1.xpose.msra.mxu0 0.0
        %1506 = vmatprep.subr.mxu0 0.0
        %1507 = vmatpush1.xpose.msra.mxu0 0.0
        %1508 = vmatprep.subr.mxu0 0.0
        %1509 = vmatpush1.xpose.msra.mxu0 0.0
        %1510 = vmatprep.subr.mxu0 0.0
        %1511 = vmatpush1.xpose.msra.mxu0 0.0
        %1512 = vmatprep.subr.mxu0 0.0
        %1513 = vmatpush1.xpose.msra.mxu0 0.0
        %1514 = vmatprep.subr.mxu0 0.0
        %1515 = vmatpush1.xpose.msra.mxu0 0.0
        %1516 = vmatprep.subr.mxu0 0.0
        %1517 = vmatpush1.xpose.msra.mxu0 0.0
        %1518 = vmatprep.subr.mxu0 0.0
        %1519 = vmatpush1.xpose.msra.mxu0 0.0
        %1520 = vmatprep.subr.mxu0 0.0
        %1521 = vmatpush1.xpose.msra.mxu0 0.0
        %1522 = vmatprep.subr.mxu0 0.0
        %1523 = vmatpush1.xpose.msra.mxu0 0.0
        %1524 = vmatprep.subr.mxu0 0.0
        %1525 = vmatpush1.xpose.msra.mxu0 0.0
        %1526 = vmatprep.subr.mxu0 0.0
        %1527 = vmatpush1.xpose.msra.mxu0 0.0
        %1528 = vmatprep.subr.mxu0 0.0
        %1529 = vmatpush1.xpose.msra.mxu0 0.0
        %1530 = vmatprep.subr.mxu0 0.0
        %1531 = vmatpush1.xpose.msra.mxu0 0.0
        %1532 = vmatprep.subr.mxu0 0.0
        %1533 = vmatpush1.xpose.msra.mxu0 0.0
        %1534 = vmatprep.subr.mxu0 0.0
        %1535 = vmatpush1.xpose.msra.mxu0 0.0
        %1536 = vmatprep.subr.mxu0 0.0
        %1537 = vmatpush1.xpose.msra.mxu0 0.0
        %1538 = vmatprep.subr.mxu0 0.0
        %1539 = vmatpush1.xpose.msra.mxu0 0.0
        %1540 = vmatprep.subr.mxu0 0.0
        %1541 = vmatpush1.xpose.msra.mxu0 0.0
        %1542 = vmatprep.subr.mxu0 0.0
        %1543 = vmatpush1.xpose.msra.mxu0 0.0
        %1544 = vmatprep.subr.mxu0 0.0
        %1545 = vmatpush1.xpose.msra.mxu0 0.0
        %1546 = vmatprep.subr.mxu0 0.0
        %1547 = vmatpush1.xpose.msra.mxu0 0.0
        %1548 = vmatprep.subr.mxu0 0.0
        %1549 = vmatpush1.xpose.msra.mxu0 0.0
        %1550 = vmatprep.mubr.f32.mxu0 0.0
        %1551 = vmatmul.mubr.f32.gmra.mrb[0].mxu0 %v1482
        %v1552 = vpop.f32.mrb[0].mxu0
        %v1553 = vadd.f32 %v652, %v1552
        %v1554 = vpop.f32.mrb[0].mxu0
        %1555 = vdwg.mxu0
        %v1556 = vsel %vm657, %v1553, -inf
        %1557 = vmax.xlane.f32.xlu0 %v1556
        %v1558 = vpop.xlane.xlu0 %1557
        %v1559 = vsub.f32 %v1553, %v1558
        %v1560 = vmul.f32 %v1559, 1.442695
        %v1561 = vpow.pop %v1560
        %v1562 = vsel %vm657, %v1561, 0.0
        %1563 = vadd.xlane.f32.xlu0 %v1562
        %v1564 = vpop.xlane.xlu0 %1563
        %v1565 = vrcp.pop %v1564
        %v1566 = vmul.f32 %v1561, %v1565
        %1567 = vrot.lane.b32.xlu0 %v643, 88
        %v1568 = vpop.permute.xlu0 %1567
        %v1571 = vsel %vm657, %v1566, 0
        %1573 = vmatprep.subr.mxu0 0.0
        %1574 = vmatpush1.msra.mxu0 %v1568
        %1575 = vmatprep.subr.mxu0 0.0
        %1576 = vmatpush1.msra.mxu0 0.0
        %1577 = vmatprep.subr.mxu0 0.0
        %1578 = vmatpush1.msra.mxu0 0.0
        %1579 = vmatprep.subr.mxu0 0.0
        %1580 = vmatpush1.msra.mxu0 0.0
        %1581 = vmatprep.subr.mxu0 0.0
        %1582 = vmatpush1.msra.mxu0 0.0
        %1583 = vmatprep.subr.mxu0 0.0
        %1584 = vmatpush1.msra.mxu0 0.0
        %1585 = vmatprep.subr.mxu0 0.0
        %1586 = vmatpush1.msra.mxu0 0.0
        %1587 = vmatprep.subr.mxu0 0.0
        %1588 = vmatpush1.msra.mxu0 0.0
        %1589 = vmatprep.subr.mxu0 0.0
        %1590 = vmatpush1.msra.mxu0 0.0
        %1591 = vmatprep.subr.mxu0 0.0
        %1592 = vmatpush1.msra.mxu0 0.0
        %1593 = vmatprep.subr.mxu0 0.0
        %1594 = vmatpush1.msra.mxu0 0.0
        %1595 = vmatprep.subr.mxu0 0.0
        %1596 = vmatpush1.msra.mxu0 0.0
        %1597 = vmatprep.subr.mxu0 0.0
        %1598 = vmatpush1.msra.mxu0 0.0
        %1599 = vmatprep.subr.mxu0 0.0
        %1600 = vmatpush1.msra.mxu0 0.0
        %1601 = vmatprep.subr.mxu0 0.0
        %1602 = vmatpush1.msra.mxu0 0.0
        %1603 = vmatprep.subr.mxu0 0.0
        %1604 = vmatpush1.msra.mxu0 0.0
        %1605 = vmatprep.subr.mxu0 0.0
        %1606 = vmatpush1.msra.mxu0 0.0
        %1607 = vmatprep.subr.mxu0 0.0
        %1608 = vmatpush1.msra.mxu0 0.0
        %1609 = vmatprep.subr.mxu0 0.0
        %1610 = vmatpush1.msra.mxu0 0.0
        %1611 = vmatprep.subr.mxu0 0.0
        %1612 = vmatpush1.msra.mxu0 0.0
        %1613 = vmatprep.subr.mxu0 0.0
        %1614 = vmatpush1.msra.mxu0 0.0
        %1615 = vmatprep.subr.mxu0 0.0
        %1616 = vmatpush1.msra.mxu0 0.0
        %1617 = vmatprep.subr.mxu0 0.0
        %1618 = vmatpush1.msra.mxu0 0.0
        %1619 = vmatprep.subr.mxu0 0.0
        %1620 = vmatpush1.msra.mxu0 0.0
        %1621 = vmatprep.subr.mxu0 0.0
        %1622 = vmatpush1.msra.mxu0 0.0
        %1623 = vmatprep.subr.mxu0 0.0
        %1624 = vmatpush1.msra.mxu0 0.0
        %1625 = vmatprep.subr.mxu0 0.0
        %1626 = vmatpush1.msra.mxu0 0.0
        %1627 = vmatprep.subr.mxu0 0.0
        %1628 = vmatpush1.msra.mxu0 0.0
        %1629 = vmatprep.subr.mxu0 0.0
        %1630 = vmatpush1.msra.mxu0 0.0
        %1631 = vmatprep.subr.mxu0 0.0
        %1632 = vmatpush1.msra.mxu0 0.0
        %1633 = vmatprep.subr.mxu0 0.0
        %1634 = vmatpush1.msra.mxu0 0.0
        %1635 = vmatprep.subr.mxu0 0.0
        %1636 = vmatpush1.msra.mxu0 0.0
        %1637 = vmatprep.mubr.f32.mxu0 0.0
        %1638 = vmatmul.mubr.f32.gmra.mrb[0].mxu0 %v1571
        %v1639 = vpop.f32.mrb[0].mxu0
        %v1640 = vadd.f32 0.0, %v1639
        %v1641 = vpop.f32.mrb[0].mxu0
        %1642 = vdwg.mxu0
        %1643 = vrot.lane.b32.xlu0 %v647, 80
        %v1644 = vpop.permute.xlu0 %1643
        %1645 = vrot.lane.b32.xlu0 %v641, 16
        %v1646 = vpop.permute.xlu0 %1645
        %v1647 = vsel %vm657, %v1644, 0
        %v1649 = vsel %vm657, %v1646, 0
        %1651 = vmatprep.subr.mxu0 0.0
        %1652 = vmatpush1.xpose.msra.mxu0 %v1649
        %1653 = vmatprep.subr.mxu0 0.0
        %1654 = vmatpush1.xpose.msra.mxu0 0.0
        %1655 = vmatprep.subr.mxu0 0.0
        %1656 = vmatpush1.xpose.msra.mxu0 0.0
        %1657 = vmatprep.subr.mxu0 0.0
        %1658 = vmatpush1.xpose.msra.mxu0 0.0
        %1659 = vmatprep.subr.mxu0 0.0
        %1660 = vmatpush1.xpose.msra.mxu0 0.0
        %1661 = vmatprep.subr.mxu0 0.0
        %1662 = vmatpush1.xpose.msra.mxu0 0.0
        %1663 = vmatprep.subr.mxu0 0.0
        %1664 = vmatpush1.xpose.msra.mxu0 0.0
        %1665 = vmatprep.subr.mxu0 0.0
        %1666 = vmatpush1.xpose.msra.mxu0 0.0
        %1667 = vmatprep.subr.mxu0 0.0
        %1668 = vmatpush1.xpose.msra.mxu0 0.0
        %1669 = vmatprep.subr.mxu0 0.0
        %1670 = vmatpush1.xpose.msra.mxu0 0.0
        %1671 = vmatprep.subr.mxu0 0.0
        %1672 = vmatpush1.xpose.msra.mxu0 0.0
        %1673 = vmatprep.subr.mxu0 0.0
        %1674 = vmatpush1.xpose.msra.mxu0 0.0
        %1675 = vmatprep.subr.mxu0 0.0
        %1676 = vmatpush1.xpose.msra.mxu0 0.0
        %1677 = vmatprep.subr.mxu0 0.0
        %1678 = vmatpush1.xpose.msra.mxu0 0.0
        %1679 = vmatprep.subr.mxu0 0.0
        %1680 = vmatpush1.xpose.msra.mxu0 0.0
        %1681 = vmatprep.subr.mxu0 0.0
        %1682 = vmatpush1.xpose.msra.mxu0 0.0
        %1683 = vmatprep.subr.mxu0 0.0
        %1684 = vmatpush1.xpose.msra.mxu0 0.0
        %1685 = vmatprep.subr.mxu0 0.0
        %1686 = vmatpush1.xpose.msra.mxu0 0.0
        %1687 = vmatprep.subr.mxu0 0.0
        %1688 = vmatpush1.xpose.msra.mxu0 0.0
        %1689 = vmatprep.subr.mxu0 0.0
        %1690 = vmatpush1.xpose.msra.mxu0 0.0
        %1691 = vmatprep.subr.mxu0 0.0
        %1692 = vmatpush1.xpose.msra.mxu0 0.0
        %1693 = vmatprep.subr.mxu0 0.0
        %1694 = vmatpush1.xpose.msra.mxu0 0.0
        %1695 = vmatprep.subr.mxu0 0.0
        %1696 = vmatpush1.xpose.msra.mxu0 0.0
        %1697 = vmatprep.subr.mxu0 0.0
        %1698 = vmatpush1.xpose.msra.mxu0 0.0
        %1699 = vmatprep.subr.mxu0 0.0
        %1700 = vmatpush1.xpose.msra.mxu0 0.0
        %1701 = vmatprep.subr.mxu0 0.0
        %1702 = vmatpush1.xpose.msra.mxu0 0.0
        %1703 = vmatprep.subr.mxu0 0.0
        %1704 = vmatpush1.xpose.msra.mxu0 0.0
        %1705 = vmatprep.subr.mxu0 0.0
        %1706 = vmatpush1.xpose.msra.mxu0 0.0
        %1707 = vmatprep.subr.mxu0 0.0
        %1708 = vmatpush1.xpose.msra.mxu0 0.0
        %1709 = vmatprep.subr.mxu0 0.0
        %1710 = vmatpush1.xpose.msra.mxu0 0.0
        %1711 = vmatprep.subr.mxu0 0.0
        %1712 = vmatpush1.xpose.msra.mxu0 0.0
        %1713 = vmatprep.subr.mxu0 0.0
        %1714 = vmatpush1.xpose.msra.mxu0 0.0
        %1715 = vmatprep.mubr.f32.mxu0 0.0
        %1716 = vmatmul.mubr.f32.gmra.mrb[0].mxu0 %v1647
        %v1717 = vpop.f32.mrb[0].mxu0
        %v1718 = vadd.f32 %v652, %v1717
        %v1719 = vpop.f32.mrb[0].mxu0
        %1720 = vdwg.mxu0
        %v1721 = vsel %vm657, %v1718, -inf
        %1722 = vmax.xlane.f32.xlu0 %v1721
        %v1723 = vpop.xlane.xlu0 %1722
        %v1724 = vsub.f32 %v1718, %v1723
        %v1725 = vmul.f32 %v1724, 1.442695
        %v1726 = vpow.pop %v1725
        %v1727 = vsel %vm657, %v1726, 0.0
        %1728 = vadd.xlane.f32.xlu0 %v1727
        %v1729 = vpop.xlane.xlu0 %1728
        %v1730 = vrcp.pop %v1729
        %v1731 = vmul.f32 %v1726, %v1730
        %1732 = vrot.lane.b32.xlu0 %v643, 80
        %v1733 = vpop.permute.xlu0 %1732
        %v1736 = vsel %vm657, %v1731, 0
        %1738 = vmatprep.subr.mxu0 0.0
        %1739 = vmatpush1.msra.mxu0 %v1733
        %1740 = vmatprep.subr.mxu0 0.0
        %1741 = vmatpush1.msra.mxu0 0.0
        %1742 = vmatprep.subr.mxu0 0.0
        %1743 = vmatpush1.msra.mxu0 0.0
        %1744 = vmatprep.subr.mxu0 0.0
        %1745 = vmatpush1.msra.mxu0 0.0
        %1746 = vmatprep.subr.mxu0 0.0
        %1747 = vmatpush1.msra.mxu0 0.0
        %1748 = vmatprep.subr.mxu0 0.0
        %1749 = vmatpush1.msra.mxu0 0.0
        %1750 = vmatprep.subr.mxu0 0.0
        %1751 = vmatpush1.msra.mxu0 0.0
        %1752 = vmatprep.subr.mxu0 0.0
        %1753 = vmatpush1.msra.mxu0 0.0
        %1754 = vmatprep.subr.mxu0 0.0
        %1755 = vmatpush1.msra.mxu0 0.0
        %1756 = vmatprep.subr.mxu0 0.0
        %1757 = vmatpush1.msra.mxu0 0.0
        %1758 = vmatprep.subr.mxu0 0.0
        %1759 = vmatpush1.msra.mxu0 0.0
        %1760 = vmatprep.subr.mxu0 0.0
        %1761 = vmatpush1.msra.mxu0 0.0
        %1762 = vmatprep.subr.mxu0 0.0
        %1763 = vmatpush1.msra.mxu0 0.0
        %1764 = vmatprep.subr.mxu0 0.0
        %1765 = vmatpush1.msra.mxu0 0.0
        %1766 = vmatprep.subr.mxu0 0.0
        %1767 = vmatpush1.msra.mxu0 0.0
        %1768 = vmatprep.subr.mxu0 0.0
        %1769 = vmatpush1.msra.mxu0 0.0
        %1770 = vmatprep.subr.mxu0 0.0
        %1771 = vmatpush1.msra.mxu0 0.0
        %1772 = vmatprep.subr.mxu0 0.0
        %1773 = vmatpush1.msra.mxu0 0.0
        %1774 = vmatprep.subr.mxu0 0.0
        %1775 = vmatpush1.msra.mxu0 0.0
        %1776 = vmatprep.subr.mxu0 0.0
        %1777 = vmatpush1.msra.mxu0 0.0
        %1778 = vmatprep.subr.mxu0 0.0
        %1779 = vmatpush1.msra.mxu0 0.0
        %1780 = vmatprep.subr.mxu0 0.0
        %1781 = vmatpush1.msra.mxu0 0.0
        %1782 = vmatprep.subr.mxu0 0.0
        %1783 = vmatpush1.msra.mxu0 0.0
        %1784 = vmatprep.subr.mxu0 0.0
        %1785 = vmatpush1.msra.mxu0 0.0
        %1786 = vmatprep.subr.mxu0 0.0
        %1787 = vmatpush1.msra.mxu0 0.0
        %1788 = vmatprep.subr.mxu0 0.0
        %1789 = vmatpush1.msra.mxu0 0.0
        %1790 = vmatprep.subr.mxu0 0.0
        %1791 = vmatpush1.msra.mxu0 0.0
        %1792 = vmatprep.subr.mxu0 0.0
        %1793 = vmatpush1.msra.mxu0 0.0
        %1794 = vmatprep.subr.mxu0 0.0
        %1795 = vmatpush1.msra.mxu0 0.0
        %1796 = vmatprep.subr.mxu0 0.0
        %1797 = vmatpush1.msra.mxu0 0.0
        %1798 = vmatprep.subr.mxu0 0.0
        %1799 = vmatpush1.msra.mxu0 0.0
        %1800 = vmatprep.subr.mxu0 0.0
        %1801 = vmatpush1.msra.mxu0 0.0
        %1802 = vmatprep.mubr.f32.mxu0 0.0
        %1803 = vmatmul.mubr.f32.gmra.mrb[0].mxu0 %v1736
        %v1804 = vpop.f32.mrb[0].mxu0
        %v1805 = vadd.f32 0.0, %v1804
        %v1806 = vpop.f32.mrb[0].mxu0
        %1807 = vdwg.mxu0
        %1808 = vrot.lane.b32.xlu0 %v647, 72
        %v1809 = vpop.permute.xlu0 %1808
        %1810 = vrot.lane.b32.xlu0 %v641, 8
        %v1811 = vpop.permute.xlu0 %1810
        %v1812 = vsel %vm657, %v1809, 0
        %v1814 = vsel %vm657, %v1811, 0
        %1816 = vmatprep.subr.mxu0 0.0
        %1817 = vmatpush1.xpose.msra.mxu0 %v1814
        %1818 = vmatprep.subr.mxu0 0.0
        %1819 = vmatpush1.xpose.msra.mxu0 0.0
        %1820 = vmatprep.subr.mxu0 0.0
        %1821 = vmatpush1.xpose.msra.mxu0 0.0
        %1822 = vmatprep.subr.mxu0 0.0
        %1823 = vmatpush1.xpose.msra.mxu0 0.0
        %1824 = vmatprep.subr.mxu0 0.0
        %1825 = vmatpush1.xpose.msra.mxu0 0.0
        %1826 = vmatprep.subr.mxu0 0.0
        %1827 = vmatpush1.xpose.msra.mxu0 0.0
        %1828 = vmatprep.subr.mxu0 0.0
        %1829 = vmatpush1.xpose.msra.mxu0 0.0
        %1830 = vmatprep.subr.mxu0 0.0
        %1831 = vmatpush1.xpose.msra.mxu0 0.0
        %1832 = vmatprep.subr.mxu0 0.0
        %1833 = vmatpush1.xpose.msra.mxu0 0.0
        %1834 = vmatprep.subr.mxu0 0.0
        %1835 = vmatpush1.xpose.msra.mxu0 0.0
        %1836 = vmatprep.subr.mxu0 0.0
        %1837 = vmatpush1.xpose.msra.mxu0 0.0
        %1838 = vmatprep.subr.mxu0 0.0
        %1839 = vmatpush1.xpose.msra.mxu0 0.0
        %1840 = vmatprep.subr.mxu0 0.0
        %1841 = vmatpush1.xpose.msra.mxu0 0.0
        %1842 = vmatprep.subr.mxu0 0.0
        %1843 = vmatpush1.xpose.msra.mxu0 0.0
        %1844 = vmatprep.subr.mxu0 0.0
        %1845 = vmatpush1.xpose.msra.mxu0 0.0
        %1846 = vmatprep.subr.mxu0 0.0
        %1847 = vmatpush1.xpose.msra.mxu0 0.0
        %1848 = vmatprep.subr.mxu0 0.0
        %1849 = vmatpush1.xpose.msra.mxu0 0.0
        %1850 = vmatprep.subr.mxu0 0.0
        %1851 = vmatpush1.xpose.msra.mxu0 0.0
        %1852 = vmatprep.subr.mxu0 0.0
        %1853 = vmatpush1.xpose.msra.mxu0 0.0
        %1854 = vmatprep.subr.mxu0 0.0
        %1855 = vmatpush1.xpose.msra.mxu0 0.0
        %1856 = vmatprep.subr.mxu0 0.0
        %1857 = vmatpush1.xpose.msra.mxu0 0.0
        %1858 = vmatprep.subr.mxu0 0.0
        %1859 = vmatpush1.xpose.msra.mxu0 0.0
        %1860 = vmatprep.subr.mxu0 0.0
        %1861 = vmatpush1.xpose.msra.mxu0 0.0
        %1862 = vmatprep.subr.mxu0 0.0
        %1863 = vmatpush1.xpose.msra.mxu0 0.0
        %1864 = vmatprep.subr.mxu0 0.0
        %1865 = vmatpush1.xpose.msra.mxu0 0.0
        %1866 = vmatprep.subr.mxu0 0.0
        %1867 = vmatpush1.xpose.msra.mxu0 0.0
        %1868 = vmatprep.subr.mxu0 0.0
        %1869 = vmatpush1.xpose.msra.mxu0 0.0
        %1870 = vmatprep.subr.mxu0 0.0
        %1871 = vmatpush1.xpose.msra.mxu0 0.0
        %1872 = vmatprep.subr.mxu0 0.0
        %1873 = vmatpush1.xpose.msra.mxu0 0.0
        %1874 = vmatprep.subr.mxu0 0.0
        %1875 = vmatpush1.xpose.msra.mxu0 0.0
        %1876 = vmatprep.subr.mxu0 0.0
        %1877 = vmatpush1.xpose.msra.mxu0 0.0
        %1878 = vmatprep.subr.mxu0 0.0
        %1879 = vmatpush1.xpose.msra.mxu0 0.0
        %1880 = vmatprep.mubr.f32.mxu0 0.0
        %1881 = vmatmul.mubr.f32.gmra.mrb[0].mxu0 %v1812
        %v1882 = vpop.f32.mrb[0].mxu0
        %v1883 = vadd.f32 %v652, %v1882
        %v1884 = vpop.f32.mrb[0].mxu0
        %1885 = vdwg.mxu0
        %v1886 = vsel %vm657, %v1883, -inf
        %1887 = vmax.xlane.f32.xlu0 %v1886
        %v1888 = vpop.xlane.xlu0 %1887
        %v1889 = vsub.f32 %v1883, %v1888
        %v1890 = vmul.f32 %v1889, 1.442695
        %v1891 = vpow.pop %v1890
        %v1892 = vsel %vm657, %v1891, 0.0
        %1893 = vadd.xlane.f32.xlu0 %v1892
        %v1894 = vpop.xlane.xlu0 %1893
        %v1895 = vrcp.pop %v1894
        %v1896 = vmul.f32 %v1891, %v1895
        %1897 = vrot.lane.b32.xlu0 %v643, 72
        %v1898 = vpop.permute.xlu0 %1897
        %v1901 = vsel %vm657, %v1896, 0
        %1903 = vmatprep.subr.mxu0 0.0
        %1904 = vmatpush1.msra.mxu0 %v1898
        %1905 = vmatprep.subr.mxu0 0.0
        %1906 = vmatpush1.msra.mxu0 0.0
        %1907 = vmatprep.subr.mxu0 0.0
        %1908 = vmatpush1.msra.mxu0 0.0
        %1909 = vmatprep.subr.mxu0 0.0
        %1910 = vmatpush1.msra.mxu0 0.0
        %1911 = vmatprep.subr.mxu0 0.0
        %1912 = vmatpush1.msra.mxu0 0.0
        %1913 = vmatprep.subr.mxu0 0.0
        %1914 = vmatpush1.msra.mxu0 0.0
        %1915 = vmatprep.subr.mxu0 0.0
        %1916 = vmatpush1.msra.mxu0 0.0
        %1917 = vmatprep.subr.mxu0 0.0
        %1918 = vmatpush1.msra.mxu0 0.0
        %1919 = vmatprep.subr.mxu0 0.0
        %1920 = vmatpush1.msra.mxu0 0.0
        %1921 = vmatprep.subr.mxu0 0.0
        %1922 = vmatpush1.msra.mxu0 0.0
        %1923 = vmatprep.subr.mxu0 0.0
        %1924 = vmatpush1.msra.mxu0 0.0
        %1925 = vmatprep.subr.mxu0 0.0
        %1926 = vmatpush1.msra.mxu0 0.0
        %1927 = vmatprep.subr.mxu0 0.0
        %1928 = vmatpush1.msra.mxu0 0.0
        %1929 = vmatprep.subr.mxu0 0.0
        %1930 = vmatpush1.msra.mxu0 0.0
        %1931 = vmatprep.subr.mxu0 0.0
        %1932 = vmatpush1.msra.mxu0 0.0
        %1933 = vmatprep.subr.mxu0 0.0
        %1934 = vmatpush1.msra.mxu0 0.0
        %1935 = vmatprep.subr.mxu0 0.0
        %1936 = vmatpush1.msra.mxu0 0.0
        %1937 = vmatprep.subr.mxu0 0.0
        %1938 = vmatpush1.msra.mxu0 0.0
        %1939 = vmatprep.subr.mxu0 0.0
        %1940 = vmatpush1.msra.mxu0 0.0
        %1941 = vmatprep.subr.mxu0 0.0
        %1942 = vmatpush1.msra.mxu0 0.0
        %1943 = vmatprep.subr.mxu0 0.0
        %1944 = vmatpush1.msra.mxu0 0.0
        %1945 = vmatprep.subr.mxu0 0.0
        %1946 = vmatpush1.msra.mxu0 0.0
        %1947 = vmatprep.subr.mxu0 0.0
        %1948 = vmatpush1.msra.mxu0 0.0
        %1949 = vmatprep.subr.mxu0 0.0
        %1950 = vmatpush1.msra.mxu0 0.0
        %1951 = vmatprep.subr.mxu0 0.0
        %1952 = vmatpush1.msra.mxu0 0.0
        %1953 = vmatprep.subr.mxu0 0.0
        %1954 = vmatpush1.msra.mxu0 0.0
        %1955 = vmatprep.subr.mxu0 0.0
        %1956 = vmatpush1.msra.mxu0 0.0
        %1957 = vmatprep.subr.mxu0 0.0
        %1958 = vmatpush1.msra.mxu0 0.0
        %1959 = vmatprep.subr.mxu0 0.0
        %1960 = vmatpush1.msra.mxu0 0.0
        %1961 = vmatprep.subr.mxu0 0.0
        %1962 = vmatpush1.msra.mxu0 0.0
        %1963 = vmatprep.subr.mxu0 0.0
        %1964 = vmatpush1.msra.mxu0 0.0
        %1965 = vmatprep.subr.mxu0 0.0
        %1966 = vmatpush1.msra.mxu0 0.0
        %1967 = vmatprep.mubr.f32.mxu0 0.0
        %1968 = vmatmul.mubr.f32.gmra.mrb[0].mxu0 %v1901
        %v1969 = vpop.f32.mrb[0].mxu0
        %v1970 = vadd.f32 0.0, %v1969
        %v1971 = vpop.f32.mrb[0].mxu0
        %1972 = vdwg.mxu0
        %1974 = vrot.lane.b32.xlu0 %v980, 8
        %v1975 = vpop.permute.xlu0 %1974
        %1978 = vrot.lane.b32.xlu0 %v1145, 16
        %v1979 = vpop.permute.xlu0 %1978
        %1982 = vrot.lane.b32.xlu0 %v1310, 24
        %v1983 = vpop.permute.xlu0 %1982
        %1986 = vrot.lane.b32.xlu0 %v1475, 32
        %v1987 = vpop.permute.xlu0 %1986
        %1990 = vrot.lane.b32.xlu0 %v1640, 40
        %v1991 = vpop.permute.xlu0 %1990
        %1994 = vrot.lane.b32.xlu0 %v1805, 48
        %v1995 = vpop.permute.xlu0 %1994
        %1998 = vrot.lane.b32.xlu0 %v1970, 56
        %v1999 = vpop.permute.xlu0 %1998
        %v2001 = vsel %vm657, %v814, %v1975
        %vm2002 = vcmask 130048
        %v2003 = vsel %vm2002, %v2001, %v1979
        %vm2004 = vcmask 195584
        %v2005 = vsel %vm2004, %v2003, %v1983
        %vm2006 = vcmask 261120
        %v2007 = vsel %vm2006, %v2005, %v1987
        %vm2008 = vcmask 326656
        %v2009 = vsel %vm2008, %v2007, %v1991
        %vm2010 = vcmask 392192
        %v2011 = vsel %vm2010, %v2009, %v1995
        %vm2012 = vcmask 457728
        %v2013 = vsel %vm2012, %v2011, %v1999
        %v2014 = vpack.c.bf16 %v2013, %v2013
        %v2015 = vld [vmem:[%s4] sm:$0xf]
        %v2016 = vld [vmem:[%s4 + $0x4] sm:$0xf]
        %v2017 = vld [vmem:[%s4 + $0x8] sm:$0xf]
        %v2018 = vld [vmem:[%s4 + $0xc] sm:$0xf]
        %v2019 = vld [vmem:[%s4 + $0x10] sm:$0xf]
        %v2020 = vld [vmem:[%s4 + $0x14] sm:$0xf]
        %v2021 = vld [vmem:[%s4 + $0x18] sm:$0xf]
        %v2022 = vld [vmem:[%s4 + $0x1c] sm:$0xf]
        %v2023 = vld [vmem:[%s5] sm:$0x1]
        %v2024 = vunpack.c.l.bf16 %v2023
        %v2025 = vlaneseq
        %v2026 = vshrl.u32 %v2025, 7
        %v2027 = vsub.s32 0, %v2026
        %v2028 = vrot.slane %v2024, %v2027
        %v2037 = vunpack.c.l.b16 %v2015
        %v2038 = vunpack.c.l.b16 %v2016
        %v2039 = vunpack.c.l.b16 %v2017
        %v2040 = vunpack.c.l.b16 %v2018
        %v2041 = vunpack.c.l.b16 %v2019
        %v2042 = vunpack.c.l.b16 %v2020
        %v2043 = vunpack.c.l.b16 %v2021
        %v2044 = vunpack.c.l.b16 %v2022
        %v2045 = vpack.c.b16 %v2038, %v2037
        %v2046 = vpack.c.b16 %v2040, %v2039
        %v2047 = vpack.c.b16 %v2042, %v2041
        %v2048 = vpack.c.b16 %v2044, %v2043
        %v2054 = vsel %vm602, %v2014, 0
        %2056 = vmatprep.subr.bf16.mxu0 0
        %2057 = vmatpush1.bf16.msra.mxu0 %v2045
        %2058 = vmatprep.subr.bf16.mxu0 0
        %2059 = vmatpush1.bf16.msra.mxu0 %v2046
        %2060 = vmatprep.subr.bf16.mxu0 0
        %2061 = vmatpush1.bf16.msra.mxu0 %v2047
        %2062 = vmatprep.subr.bf16.mxu0 0
        %2063 = vmatpush1.bf16.msra.mxu0 %v2048
        %2064 = vmatprep.subr.bf16.mxu0 0
        %2065 = vmatpush1.bf16.msra.mxu0 0
        %2066 = vmatprep.subr.bf16.mxu0 0
        %2067 = vmatpush1.bf16.msra.mxu0 0
        %2068 = vmatprep.subr.bf16.mxu0 0
        %2069 = vmatpush1.bf16.msra.mxu0 0
        %2070 = vmatprep.subr.bf16.mxu0 0
        %2071 = vmatpush1.bf16.msra.mxu0 0
        %2072 = vmatprep.subr.bf16.mxu0 0
        %2073 = vmatpush1.bf16.msra.mxu0 0
        %2074 = vmatprep.subr.bf16.mxu0 0
        %2075 = vmatpush1.bf16.msra.mxu0 0
        %2076 = vmatprep.subr.bf16.mxu0 0
        %2077 = vmatpush1.bf16.msra.mxu0 0
        %2078 = vmatprep.subr.bf16.mxu0 0
        %2079 = vmatpush1.bf16.msra.mxu0 0
        %2080 = vmatprep.subr.bf16.mxu0 0
        %2081 = vmatpush1.bf16.msra.mxu0 0
        %2082 = vmatprep.subr.bf16.mxu0 0
        %2083 = vmatpush1.bf16.msra.mxu0 0
        %2084 = vmatprep.subr.bf16.mxu0 0
        %2085 = vmatpush1.bf16.msra.mxu0 0
        %2086 = vmatprep.subr.bf16.mxu0 0
        %2087 = vmatpush1.bf16.msra.mxu0 0
        %2088 = vmatprep.mubr.bf16.mxu0 0
        %2089 = vmatmul.mubr.bf16.gmra.mrb[0].mxu0 %v2054
        %v2090 = vpop.f32.mrb[0].mxu0
        %v2091 = vadd.f32 %v2028, %v2090
        %v2092 = vpop.f32.mrb[0].mxu0
        %v2093 = vpop.f32.mrb[0].mxu0
        %v2094 = vpop.f32.mrb[0].mxu0
        %2095 = vdwg.mxu0
        %v2096 = vunpack.c.l.bf16 %v531
        %v2097 = vadd.f32 %v2096, %v2091
        %v2098 = vsel %vm602, %v2097, 0.0
        %2099 = vadd.xlane.f32.xlu0 %v2098
        %v2100 = vpop.xlane.xlu0 %2099
        %v2101 = vrcp.pop 64.0
        %v2102 = vmul.f32 %v2100, %v2101
        %v2103 = vsub.f32 %v2097, %v2102
        %v2104 = vmul.f32 %v2103, %v2103
        %v2105 = vsel %vm602, %v2104, 0.0
        %2106 = vadd.xlane.f32.xlu0 %v2105
        %v2107 = vpop.xlane.xlu0 %2106
        %v2108 = vmul.f32 %v2107, %v2101
        %v2109 = vadd.f32 %v2108, 1e-05
        %v2110 = vrsqrt.pop %v2109
        %v2111 = vmul.f32 %v2103, %v2110
        %v2112 = vld [vmem:[%s6] sm:$0x1]
        %v2113 = vunpack.c.l.bf16 %v2112
        %v2114 = vlaneseq
        %v2115 = vshrl.u32 %v2114, 7
        %v2116 = vsub.s32 0, %v2115
        %v2117 = vrot.slane %v2113, %v2116
        %v2118 = vmul.f32 %v2111, %v2117
        %v2119 = vld [vmem:[%s7] sm:$0x1]
        %v2120 = vunpack.c.l.bf16 %v2119
        %v2121 = vlaneseq
        %v2122 = vshrl.u32 %v2121, 7
        %v2123 = vsub.s32 0, %v2122
        %v2124 = vrot.slane %v2120, %v2123
        %v2125 = vadd.f32 %v2118, %v2124
        %v2126 = vpack.c.bf16 %v2125, %v2125
        %v2127 = vld [vmem:[%s8] sm:$0xf]
        %v2128 = vld [vmem:[%s8 + $0x4] sm:$0xf]
        %v2129 = vld [vmem:[%s8 + $0x8] sm:$0xf]
        %v2130 = vld [vmem:[%s8 + $0xc] sm:$0xf]
        %v2131 = vld [vmem:[%s8 + $0x10] sm:$0xf]
        %v2132 = vld [vmem:[%s8 + $0x14] sm:$0xf]
        %v2133 = vld [vmem:[%s8 + $0x18] sm:$0xf]
        %v2134 = vld [vmem:[%s8 + $0x1c] sm:$0xf]
        %v2135 = vld [vmem:[%s9] sm:$0x1]
        %v2136 = vunpack.c.l.bf16 %v2135
        %v2137 = vlaneseq
        %v2138 = vshrl.u32 %v2137, 7
        %v2139 = vsub.s32 0, %v2138
        %v2140 = vrot.slane %v2136, %v2139
        %v2149 = vunpack.c.l.b16 %v2127
        %v2150 = vunpack.c.l.b16 %v2128
        %v2151 = vunpack.c.l.b16 %v2129
        %v2152 = vunpack.c.l.b16 %v2130
        %v2153 = vunpack.c.l.b16 %v2131
        %v2154 = vunpack.c.l.b16 %v2132
        %v2155 = vunpack.c.l.b16 %v2133
        %v2156 = vunpack.c.l.b16 %v2134
        %v2157 = vpack.c.b16 %v2150, %v2149
        %v2158 = vpack.c.b16 %v2152, %v2151
        %v2159 = vpack.c.b16 %v2154, %v2153
        %v2160 = vpack.c.b16 %v2156, %v2155
        %v2166 = vsel %vm602, %v2126, 0
        %2168 = vmatprep.subr.bf16.mxu0 0
        %2169 = vmatpush1.bf16.msra.mxu0 %v2157
        %2170 = vmatprep.subr.bf16.mxu0 0
        %2171 = vmatpush1.bf16.msra.mxu0 %v2158
        %2172 = vmatprep.subr.bf16.mxu0 0
        %2173 = vmatpush1.bf16.msra.mxu0 %v2159
        %2174 = vmatprep.subr.bf16.mxu0 0
        %2175 = vmatpush1.bf16.msra.mxu0 %v2160
        %2176 = vmatprep.subr.bf16.mxu0 0
        %2177 = vmatpush1.bf16.msra.mxu0 0
        %2178 = vmatprep.subr.bf16.mxu0 0
        %2179 = vmatpush1.bf16.msra.mxu0 0
        %2180 = vmatprep.subr.bf16.mxu0 0
        %2181 = vmatpush1.bf16.msra.mxu0 0
        %2182 = vmatprep.subr.bf16.mxu0 0
        %2183 = vmatpush1.bf16.msra.mxu0 0
        %2184 = vmatprep.subr.bf16.mxu0 0
        %2185 = vmatpush1.bf16.msra.mxu0 0
        %2186 = vmatprep.subr.bf16.mxu0 0
        %2187 = vmatpush1.bf16.msra.mxu0 0
        %2188 = vmatprep.subr.bf16.mxu0 0
        %2189 = vmatpush1.bf16.msra.mxu0 0
        %2190 = vmatprep.subr.bf16.mxu0 0
        %2191 = vmatpush1.bf16.msra.mxu0 0
        %2192 = vmatprep.subr.bf16.mxu0 0
        %2193 = vmatpush1.bf16.msra.mxu0 0
        %2194 = vmatprep.subr.bf16.mxu0 0
        %2195 = vmatpush1.bf16.msra.mxu0 0
        %2196 = vmatprep.subr.bf16.mxu0 0
        %2197 = vmatpush1.bf16.msra.mxu0 0
        %2198 = vmatprep.subr.bf16.mxu0 0
        %2199 = vmatpush1.bf16.msra.mxu0 0
        %2200 = vmatprep.mubr.bf16.mxu0 0
        %2201 = vmatmul.mubr.bf16.gmra.mrb[0].mxu0 %v2166
        %v2202 = vpop.f32.mrb[0].mxu0
        %v2203 = vadd.f32 %v2140, %v2202
        %v2204 = vpop.f32.mrb[0].mxu0
        %v2205 = vpop.f32.mrb[0].mxu0
        %v2206 = vpop.f32.mrb[0].mxu0
        %2207 = vdwg.mxu0
        %v2208 = vmax.f32 %v2203, 0.0
        %v2209 = vpack.c.bf16 %v2208, %v2208
        %v2210 = vld [vmem:[%s10] sm:$0xf]
        %v2211 = vld [vmem:[%s10 + $0x4] sm:$0xf]
        %v2212 = vld [vmem:[%s10 + $0x8] sm:$0xf]
        %v2213 = vld [vmem:[%s10 + $0xc] sm:$0xf]
        %v2214 = vld [vmem:[%s10 + $0x10] sm:$0xf]
        %v2215 = vld [vmem:[%s10 + $0x14] sm:$0xf]
        %v2216 = vld [vmem:[%s10 + $0x18] sm:$0xf]
        %v2217 = vld [vmem:[%s10 + $0x1c] sm:$0xf]
        %v2218 = vld [vmem:[%s10 + $0x20] sm:$0xf]
        %v2219 = vld [vmem:[%s10 + $0x24] sm:$0xf]
        %v2220 = vld [vmem:[%s10 + $0x28] sm:$0xf]
        %v2221 = vld [vmem:[%s10 + $0x2c] sm:$0xf]
        %v2222 = vld [vmem:[%s10 + $0x30] sm:$0xf]
        %v2223 = vld [vmem:[%s10 + $0x34] sm:$0xf]
        %v2224 = vld [vmem:[%s10 + $0x38] sm:$0xf]
        %v2225 = vld [vmem:[%s10 + $0x3c] sm:$0xf]
        %v2226 = vld [vmem:[%s11] sm:$0x1]
        %v2227 = vunpack.c.l.bf16 %v2226
        %v2228 = vlaneseq
        %v2229 = vshrl.u32 %v2228, 7
        %v2230 = vsub.s32 0, %v2229
        %v2231 = vrot.slane %v2227, %v2230
        %v2248 = vunpack.c.l.b16 %v2210
        %v2249 = vunpack.c.l.b16 %v2211
        %v2250 = vunpack.c.l.b16 %v2212
        %v2251 = vunpack.c.l.b16 %v2213
        %v2252 = vunpack.c.l.b16 %v2214
        %v2253 = vunpack.c.l.b16 %v2215
        %v2254 = vunpack.c.l.b16 %v2216
        %v2255 = vunpack.c.l.b16 %v2217
        %v2256 = vunpack.c.l.b16 %v2218
        %v2257 = vunpack.c.l.b16 %v2219
        %v2258 = vunpack.c.l.b16 %v2220
        %v2259 = vunpack.c.l.b16 %v2221
        %v2260 = vunpack.c.l.b16 %v2222
        %v2261 = vunpack.c.l.b16 %v2223
        %v2262 = vunpack.c.l.b16 %v2224
        %v2263 = vunpack.c.l.b16 %v2225
        %v2264 = vpack.c.b16 %v2249, %v2248
        %v2265 = vpack.c.b16 %v2251, %v2250
        %v2266 = vpack.c.b16 %v2253, %v2252
        %v2267 = vpack.c.b16 %v2255, %v2254
        %v2268 = vpack.c.b16 %v2257, %v2256
        %v2269 = vpack.c.b16 %v2259, %v2258
        %v2270 = vpack.c.b16 %v2261, %v2260
        %v2271 = vpack.c.b16 %v2263, %v2262
        %2280 = vmatprep.subr.bf16.mxu0 0
        %2281 = vmatpush1.bf16.msra.mxu0 %v2264
        %2282 = vmatprep.subr.bf16.mxu0 0
        %2283 = vmatpush1.bf16.msra.mxu0 %v2265
        %2284 = vmatprep.subr.bf16.mxu0 0
        %2285 = vmatpush1.bf16.msra.mxu0 %v2266
        %2286 = vmatprep.subr.bf16.mxu0 0
        %2287 = vmatpush1.bf16.msra.mxu0 %v2267
        %2288 = vmatprep.subr.bf16.mxu0 0
        %2289 = vmatpush1.bf16.msra.mxu0 %v2268
        %2290 = vmatprep.subr.bf16.mxu0 0
        %2291 = vmatpush1.bf16.msra.mxu0 %v2269
        %2292 = vmatprep.subr.bf16.mxu0 0
        %2293 = vmatpush1.bf16.msra.mxu0 %v2270
        %2294 = vmatprep.subr.bf16.mxu0 0
        %2295 = vmatpush1.bf16.msra.mxu0 %v2271
        %2296 = vmatprep.subr.bf16.mxu0 0
        %2297 = vmatpush1.bf16.msra.mxu0 0
        %2298 = vmatprep.subr.bf16.mxu0 0
        %2299 = vmatpush1.bf16.msra.mxu0 0
        %2300 = vmatprep.subr.bf16.mxu0 0
        %2301 = vmatpush1.bf16.msra.mxu0 0
        %2302 = vmatprep.subr.bf16.mxu0 0
        %2303 = vmatpush1.bf16.msra.mxu0 0
        %2304 = vmatprep.subr.bf16.mxu0 0
        %2305 = vmatpush1.bf16.msra.mxu0 0
        %2306 = vmatprep.subr.bf16.mxu0 0
        %2307 = vmatpush1.bf16.msra.mxu0 0
        %2308 = vmatprep.subr.bf16.mxu0 0
        %2309 = vmatpush1.bf16.msra.mxu0 0
        %2310 = vmatprep.subr.bf16.mxu0 0
        %2311 = vmatpush1.bf16.msra.mxu0 0
        %2312 = vmatprep.mubr.bf16.mxu0 0
        %2313 = vmatmul.mubr.bf16.gmra.mrb[0].mxu0 %v2209
        %v2314 = vpop.f32.mrb[0].mxu0
        %v2315 = vadd.f32 %v2231, %v2314
        %v2316 = vpop.f32.mrb[0].mxu0
        %v2317 = vpop.f32.mrb[0].mxu0
        %v2318 = vpop.f32.mrb[0].mxu0
        %2319 = vdwg.mxu0
        %v2320 = vadd.f32 %v2125, %v2315
        %v2321 = vsel %vm602, %v2320, 0.0
        %2322 = vadd.xlane.f32.xlu0 %v2321
        %v2323 = vpop.xlane.xlu0 %2322
        %v2324 = vmul.f32 %v2323, %v2101
        %v2325 = vsub.f32 %v2320, %v2324
        %v2326 = vmul.f32 %v2325, %v2325
        %v2327 = vsel %vm602, %v2326, 0.0
        %2328 = vadd.xlane.f32.xlu0 %v2327
        %v2329 = vpop.xlane.xlu0 %2328
        %v2330 = vmul.f32 %v2329, %v2101
        %v2331 = vadd.f32 %v2330, 1e-05
        %v2332 = vrsqrt.pop %v2331
        %v2333 = vmul.f32 %v2325, %v2332
        %v2334 = vld [vmem:[%s12] sm:$0x1]
        %v2335 = vunpack.c.l.bf16 %v2334
        %v2336 = vlaneseq
        %v2337 = vshrl.u32 %v2336, 7
        %v2338 = vsub.s32 0, %v2337
        %v2339 = vrot.slane %v2335, %v2338
        %v2340 = vmul.f32 %v2333, %v2339
        %v2341 = vld [vmem:[%s13] sm:$0x1]
        %v2342 = vunpack.c.l.bf16 %v2341
        %v2343 = vlaneseq
        %v2344 = vshrl.u32 %v2343, 7
        %v2345 = vsub.s32 0, %v2344
        %v2346 = vrot.slane %v2342, %v2345
        %v2347 = vadd.f32 %v2340, %v2346
        %v2348 = vsel %vm602, %v2347, 0.0
        %2349 = vadd.xlane.f32.xlu0 %v2348
        %v2350 = vpop.xlane.xlu0 %2349
        %v2351 = vmul.f32 %v2350, %v2101
        %v2352 = vsub.f32 %v2347, %v2351
        %v2353 = vmul.f32 %v2352, %v2352
        %v2354 = vsel %vm602, %v2353, 0.0
        %2355 = vadd.xlane.f32.xlu0 %v2354
        %v2356 = vpop.xlane.xlu0 %2355
        %v2357 = vmul.f32 %v2356, %v2101
        %v2358 = vadd.f32 %v2357, 1e-05
        %v2359 = vrsqrt.pop %v2358
        %v2360 = vmul.f32 %v2352, %v2359
        %v2361 = vld [vmem:[%s14] sm:$0x1]
        %v2362 = vunpack.c.l.bf16 %v2361
        %v2363 = vlaneseq
        %v2364 = vshrl.u32 %v2363, 7
        %v2365 = vsub.s32 0, %v2364
        %v2366 = vrot.slane %v2362, %v2365
        %v2367 = vmul.f32 %v2360, %v2366
        %v2368 = vld [vmem:[%s15] sm:$0x1]
        %v2369 = vunpack.c.l.bf16 %v2368
        %v2370 = vlaneseq
        %v2371 = vshrl.u32 %v2370, 7
        %v2372 = vsub.s32 0, %v2371
        %v2373 = vrot.slane %v2369, %v2372
        %v2374 = vadd.f32 %v2367, %v2373
        %vm2375 = vcmask 516096
        %2376 = vst.msk [vmem:[%s522] sm:$0x1] %vm2375, %v2374
        %s2377 = sand.u32 %s384, 1
        %s2378 = scalar_lea.sflag [#allocation3], %s2377
        %s2379 = sand.u32 %s384, 1
        %s2380 = scalar_lea.vmem [#allocation2], %s2379
        // Predicated region
        $region85: #{transformer_encoder_forward.1} parent=83 // pred_check
          %p2381 = pneg %p394
        $region86: #{transformer_encoder_forward.1} parent=83 // pred_check_branch
          %2383 = sbr.rel (%p2381) target = $region88
        $region87: #{transformer_encoder_forward.1} parent=83 // pred_region
          %s2385 = ssub.s32 16, 16
          %2386 = vsyncadd %s2378, %s2385
          %s2387 = smul.addr %s30, 16
          %s2388 = scalar_lea.hbm %s16, %s2387
          %s2390 = sshll.u32 %s2380, 4
          %s2391 = int_to_ptr.vmem [resolvable:$true] %s2390
          %2393 = dma.vmem_to_hbm [thread:$0]  %s2391, 16, %s2388, %s2378
        $region88: #{transformer_encoder_forward.1} parent=83 // pred_fallthru
          _
      $region84: #{transformer_encoder_forward.1} parent=5 // pred_fallthru
        _
      %p2394 = scmp.le.s32.totalorder 2, %s25
      // Predicated region
      $region89: #{transformer_encoder_forward.1} parent=5 // pred_check
        %p2395 = pneg %p2394
      $region90: #{transformer_encoder_forward.1} parent=5 // pred_check_branch
        %2397 = sbr.rel (%p2395) target = $region92
      $region91: #{transformer_encoder_forward.1} parent=5 // pred_region
        %s2398 = ssub.s32 %s25, 2
        // Predicated region
        $region93: #{transformer_encoder_forward.1} parent=91 // pred_check
          %p2399 = pneg %p400
        $region94: #{transformer_encoder_forward.1} parent=91 // pred_check_branch
          %2401 = sbr.rel (%p2399) target = $region96
        $region95: #{transformer_encoder_forward.1} parent=91 // pred_region
          %s2402 = sand.u32 %s385, 1
          %s2403 = scalar_lea.sflag [#allocation3], %s2402
          %s2404 = sand.u32 %s385, 1
          %s2405 = scalar_lea.vmem [#allocation2], %s2404
          %2406 = dma.done %s2403, 16
        $region96: #{transformer_encoder_forward.1} parent=91 // pred_fallthru
          _
      $region92: #{transformer_encoder_forward.1} parent=5 // pred_fallthru
        _
    $region6: #{transformer_encoder_forward.1} parent=1 // loop_footer
      %s29 = sadd.s32 1, %s25
    $region7: #{transformer_encoder_forward.1} parent=1 // loop_footer_branch
      %24 = sbr.rel target = $region3
    $region8: #{transformer_encoder_forward.1} parent=1 // loop_exit
      _
    %2407 = vsyncpa [#allocation3], 1
    %s2408 = scalar_lea.sflag [#allocation3], 1
    %2409 = vsyncpa %s2408, 1

</llo_original>
